<compile_context>
chip_gen: v7x
topology: tpu7x:2x2x1
jax: 0.10.0
libtpu: 0.0.40
codegen_flags: <defaults>
</compile_context>

<pallas_src>
import functools

import jax
import jax.numpy as jnp
from jax.experimental import pallas as pl
from jax.experimental.pallas import tpu as pltpu

K_IN = 28 * 28   # 784
H_OUT = 400
N_OUT = 2

K_PAD = 896      # 784 -> multiple of 128
H_PAD = 512      # 400 -> multiple of 128
N_PAD = 128      # 2   -> lane-dense output


def _round_up(n, m):
    return (n + m - 1) // m * m


def mlp_kernel(x_ref, w1_ref, b1_ref, w2_ref, b2_ref, o_ref):
    # fc1: (TB, K_PAD) @ (K_PAD, H_PAD) + (1, H_PAD), ReLU.  f32 accumulation on MXU.
    h = jnp.dot(x_ref[...], w1_ref[...], preferred_element_type=jnp.float32)
    h = jnp.maximum(h + b1_ref[...], 0.0)
    # fc2: (TB, H_PAD) @ (H_PAD, N_PAD) + (1, N_PAD)  (lane-dense 128-wide output).
    o = jnp.dot(h.astype(w2_ref.dtype), w2_ref[...],
                preferred_element_type=jnp.float32)
    o_ref[...] = (o + b2_ref[...]).astype(o_ref.dtype)


def prepare_params(w1, b1, w2, b2, compute_dtype=jnp.float32):
    """One-time prep: transpose + zero-pad PyTorch-layout weights.

    w1: (400, 784), b1: (400,), w2: (2, 400), b2: (2,)
    Returns (w1_t, b1_r, w2_t, b2_r) padded to (896,512),(1,512),(512,128),(1,128).
    """
    w1_t = jnp.zeros((K_PAD, H_PAD), compute_dtype)
    w1_t = w1_t.at[:K_IN, :H_OUT].set(w1.T.astype(compute_dtype))
    b1_r = jnp.zeros((1, H_PAD), jnp.float32).at[:, :H_OUT].set(b1.astype(jnp.float32))
    w2_t = jnp.zeros((H_PAD, N_PAD), compute_dtype)
    w2_t = w2_t.at[:H_OUT, :N_OUT].set(w2.T.astype(compute_dtype))
    b2_r = jnp.zeros((1, N_PAD), jnp.float32).at[:, :N_OUT].set(b2.astype(jnp.float32))
    return w1_t, b1_r, w2_t, b2_r


@functools.partial(jax.jit, static_argnames=("tb_max",))
def net_forward(x, w1_t, b1_r, w2_t, b2_r, *, tb_max=512):
    """Forward pass. x: (B, 784). Returns (B, 2) float32."""
    B, K = x.shape
    assert K == K_IN
    compute_dtype = w1_t.dtype

    # Batch tile: multiple of 8 (sublane), capped for VMEM headroom on v7x/v5e.
    TB = min(tb_max, _round_up(B, 8))
    B_pad = _round_up(B, TB)

    # Zero-pad x to (B_pad, K_PAD); padded rows/cols are sliced off / inert.
    x_p = jnp.zeros((B_pad, K_PAD), compute_dtype)
    x_p = x_p.at[:B, :K].set(x.astype(compute_dtype))

    out = pl.pallas_call(
        mlp_kernel,
        out_shape=jax.ShapeDtypeStruct((B_pad, N_PAD), jnp.float32),
        grid_spec=pl.GridSpec(
            grid=(B_pad // TB,),
            in_specs=[
                pl.BlockSpec((TB, K_PAD), lambda i: (i, 0)),        # x: streams over batch
                pl.BlockSpec((K_PAD, H_PAD), lambda i: (0, 0)),     # W1: resident
                pl.BlockSpec((1, H_PAD), lambda i: (0, 0)),         # b1: resident
                pl.BlockSpec((H_PAD, N_PAD), lambda i: (0, 0)),     # W2: resident
                pl.BlockSpec((1, N_PAD), lambda i: (0, 0)),         # b2: resident
            ],
            out_specs=pl.BlockSpec((TB, N_PAD), lambda i: (i, 0)),  # lane-dense out
        ),
        compiler_params=pltpu.CompilerParams(
            dimension_semantics=("parallel",),      # megacore sharding on v7x
            vmem_limit_bytes=48 * 1024 * 1024,
        ),
    )(x_p, w1_t, b1_r, w2_t, b2_r)

    return out[:B, :N_OUT]


def init_params(key):
    # Deterministic synthetic init mimicking nn.Linear's uniform(-1/sqrt(fan_in), +)
    k1, k2, k3, k4 = jax.random.split(key, 4)
    bound1 = 1.0 / jnp.sqrt(float(K_IN))
    bound2 = 1.0 / jnp.sqrt(float(H_OUT))
    w1 = jax.random.uniform(k1, (H_OUT, K_IN), jnp.float32, -bound1, bound1)
    b1 = jax.random.uniform(k2, (H_OUT,), jnp.float32, -bound1, bound1)
    w2 = jax.random.uniform(k3, (N_OUT, H_OUT), jnp.float32, -bound2, bound2)
    b2 = jax.random.uniform(k4, (N_OUT,), jnp.float32, -bound2, bound2)
    return w1, b1, w2, b2


if __name__ == "__main__":
    key = jax.random.PRNGKey(0)
    kx, kp = jax.random.split(key)
    B = 8
    x = jax.random.normal(kx, (B, K_IN), jnp.float32)
    w1, b1, w2, b2 = init_params(kp)

    # One-time parameter prep (hoisted out of the per-call path).
    params = prepare_params(w1, b1, w2, b2, compute_dtype=jnp.float32)

    out = net_forward(x, *params)
    out = jax.block_until_ready(out)

    # Pure-JAX reference of the same forward pass (exact f32 path -> tight tol).
    ref = jnp.maximum(x @ w1.T + b1, 0.0) @ w2.T + b2
    assert out.shape == (B, N_OUT)
    assert jnp.allclose(out, ref, atol=1e-4, rtol=1e-4), (
        float(jnp.max(jnp.abs(out - ref))))

    print("KERNEL_OK")
</pallas_src>

<mosaic_0001>
module attributes {stable_mosaic.version = 11 : i64} {
  func.func @mlp_kernel(%arg0: i32, %arg1: memref<8x896xf32, #tpu.memory_space<vmem>>, %arg2: memref<896x512xf32, #tpu.memory_space<vmem>>, %arg3: memref<1x512xf32, #tpu.memory_space<vmem>>, %arg4: memref<512x128xf32, #tpu.memory_space<vmem>>, %arg5: memref<1x128xf32, #tpu.memory_space<vmem>>, %arg6: memref<8x128xf32, #tpu.memory_space<vmem>>) attributes {dimension_semantics = [#tpu.dimension_semantics<parallel>], iteration_bounds = array<i64: 1>, scalar_prefetch = 0 : i64, scratch_operands = 0 : i64, tpu.core_type = #tpu.core_type<tc>, window_params = [{transform_indices = @transform_0, window_bounds = array<i64: 8, 896>}, {pipeline_mode = #tpu.pipeline_mode<synchronous>, transform_indices = @transform_1, window_bounds = array<i64: 896, 512>}, {pipeline_mode = #tpu.pipeline_mode<synchronous>, transform_indices = @transform_2, window_bounds = array<i64: 1, 512>}, {pipeline_mode = #tpu.pipeline_mode<synchronous>, transform_indices = @transform_3, window_bounds = array<i64: 512, 128>}, {pipeline_mode = #tpu.pipeline_mode<synchronous>, transform_indices = @transform_4, window_bounds = array<i64: 1, 128>}, {transform_indices = @transform_5, window_bounds = array<i64: 8, 128>}]} {
    %c0 = arith.constant 0 : index
    %c0_0 = arith.constant 0 : index
    %0 = vector.load %arg1[%c0, %c0_0] : memref<8x896xf32, #tpu.memory_space<vmem>>, vector<8x896xf32>
    %c0_1 = arith.constant 0 : index
    %c0_2 = arith.constant 0 : index
    %1 = vector.load %arg2[%c0_1, %c0_2] : memref<896x512xf32, #tpu.memory_space<vmem>>, vector<896x512xf32>
    %cst = arith.constant dense<0.000000e+00> : vector<8x512xf32>
    %2 = tpu.matmul %0, %1, %cst {dimension_numbers = #tpu.dot_dimension_numbers<[1], [0], [0], [1], [0, 0, 1, 1], [], []>} : vector<8x896xf32>, vector<896x512xf32>, vector<8x512xf32> -> vector<8x512xf32>
    %c0_3 = arith.constant 0 : index
    %c0_4 = arith.constant 0 : index
    %3 = vector.load %arg3[%c0_3, %c0_4] : memref<1x512xf32, #tpu.memory_space<vmem>>, vector<1x512xf32>
    %4 = vector.broadcast %3 : vector<1x512xf32> to vector<8x512xf32>
    %5 = arith.addf %2, %4 : vector<8x512xf32>
    %cst_5 = arith.constant 0.000000e+00 : f32
    %6 = vector.broadcast %cst_5 : f32 to vector<8x512xf32>
    %7 = arith.maximumf %5, %6 : vector<8x512xf32>
    %c0_6 = arith.constant 0 : index
    %c0_7 = arith.constant 0 : index
    %8 = vector.load %arg4[%c0_6, %c0_7] : memref<512x128xf32, #tpu.memory_space<vmem>>, vector<512x128xf32>
    %cst_8 = arith.constant dense<0.000000e+00> : vector<8x128xf32>
    %9 = tpu.matmul %7, %8, %cst_8 {dimension_numbers = #tpu.dot_dimension_numbers<[1], [0], [0], [1], [0, 0, 1, 1], [], []>} : vector<8x512xf32>, vector<512x128xf32>, vector<8x128xf32> -> vector<8x128xf32>
    %c0_9 = arith.constant 0 : index
    %c0_10 = arith.constant 0 : index
    %10 = vector.load %arg5[%c0_9, %c0_10] : memref<1x128xf32, #tpu.memory_space<vmem>>, vector<1x128xf32>
    %11 = vector.broadcast %10 : vector<1x128xf32> to vector<8x128xf32>
    %12 = arith.addf %9, %11 : vector<8x128xf32>
    %c0_11 = arith.constant 0 : index
    %c0_12 = arith.constant 0 : index
    %13 = vector.load %arg6[%c0_11, %c0_12] : memref<8x128xf32, #tpu.memory_space<vmem>>, vector<8x128xf32>
    tpu.vector_store %arg6[%c0_11, %c0_12], %12 {strides = array<i32>} : memref<8x128xf32, #tpu.memory_space<vmem>>, vector<8x128xf32>,
    return
  }
  func.func @transform_0(%arg0: i32) -> (i32, i32) {
    %c0_i32 = arith.constant 0 : i32
    %c0_i32_0 = arith.constant 0 : i32
    return %arg0, %c0_i32 : i32, i32
  }
  func.func @transform_1(%arg0: i32) -> (i32, i32) {
    %c0_i32 = arith.constant 0 : i32
    %c0_i32_0 = arith.constant 0 : i32
    %c0_i32_1 = arith.constant 0 : i32
    return %c0_i32, %c0_i32_0 : i32, i32
  }
  func.func @transform_2(%arg0: i32) -> (i32, i32) {
    %c0_i32 = arith.constant 0 : i32
    %c0_i32_0 = arith.constant 0 : i32
    %c0_i32_1 = arith.constant 0 : i32
    return %c0_i32, %c0_i32_0 : i32, i32
  }
  func.func @transform_3(%arg0: i32) -> (i32, i32) {
    %c0_i32 = arith.constant 0 : i32
    %c0_i32_0 = arith.constant 0 : i32
    %c0_i32_1 = arith.constant 0 : i32
    return %c0_i32, %c0_i32_0 : i32, i32
  }
  func.func @transform_4(%arg0: i32) -> (i32, i32) {
    %c0_i32 = arith.constant 0 : i32
    %c0_i32_0 = arith.constant 0 : i32
    %c0_i32_1 = arith.constant 0 : i32
    return %c0_i32, %c0_i32_0 : i32, i32
  }
  func.func @transform_5(%arg0: i32) -> (i32, i32) {
    %c0_i32 = arith.constant 0 : i32
    %c0_i32_0 = arith.constant 0 : i32
    return %arg0, %c0_i32 : i32, i32
  }
}

</mosaic_0001>

<llo_original>
// kernel: net_forward.1
$region0: #{net_forward.1}
  #allocation0 [shape = 'u32[]', space=smem, size = 0x4, offset = 0x4, fixed_abs, tag = 'smem constant byte address 0x4 - core index']
  #allocation1 [shape = 'u32[144,128]{1,0:T(1,128)}', space=vmem, size = 0x12000, scoped, tag = 'internal scratch']
  %s0 = inlined_call_operand.vmem [shape: f32[8,896], index: 0, kind: input, shape index: {}]
  %s1 = inlined_call_operand.hbm [shape: f32[896,512], index: 1, kind: input, shape index: {}]
  %s2 = inlined_call_operand.hbm [shape: f32[1,512], index: 2, kind: input, shape index: {}]
  %s3 = inlined_call_operand.hbm [shape: f32[512,128], index: 3, kind: input, shape index: {}]
  %s4 = inlined_call_operand.hbm [shape: f32[1,128], index: 4, kind: input, shape index: {}]
  %s5 = inlined_call_operand.vmem [shape: f32[8,128], index: 5, kind: output, shape index: {}]
  %s6 = sld [smem:[#allocation0]]
  $region46: #{net_forward.1} parent=0
    _
  %s8 = ssub.s32 1, %s6
  %s9 = scalar_select 0, %s8, %s6
  $region1: #{net_forward.1} parent=0
    #allocation2 [shape = 'u8[1835008]{0}', space=vmem, size = 0x1c0000, scoped, tag = 'input window, operand 1, single buffered']
    #allocation3 [shape = 's32[1]{0}', space=sflag, size = 0x4, scoped, tag = 'scoped memory for net_forward.1']
    #allocation4 [shape = 'u8[2048]{0}', space=vmem, size = 0x800, scoped, tag = 'input window, operand 2, single buffered']
    #allocation5 [shape = 's32[1]{0}', space=sflag, size = 0x4, scoped, tag = 'scoped memory for net_forward.1']
    #allocation6 [shape = 'u8[262144]{0}', space=vmem, size = 0x40000, scoped, tag = 'input window, operand 3, single buffered']
    #allocation7 [shape = 'u8[512]{0}', space=vmem, size = 0x400, scoped, tag = 'input window, operand 4, single buffered']
    #allocation8 [shape = 's32[1]{0}', space=sflag, size = 0x4, scoped, tag = 'scoped memory for net_forward.1']
    %10 = vsyncpa [#allocation3], 0
    %11 = vsyncpa [#allocation5], 0
    %12 = vsyncpa [#allocation8], 0
    // Predicated region
    $region2: #{net_forward.1} parent=1 // pred_check
      _
    $region3: #{net_forward.1} parent=1 // pred_check_branch
      %14 = sbr.rel (0) target = $region5
    $region4: #{net_forward.1} parent=1 // pred_region
      _
    $region5: #{net_forward.1} parent=1 // pred_fallthru
      _
    // Predicated region
    $region6: #{net_forward.1} parent=1 // pred_check
      _
    $region7: #{net_forward.1} parent=1 // pred_check_branch
      %16 = sbr.rel (0) target = $region9
    $region8: #{net_forward.1} parent=1 // pred_region
      %s18 = ssub.s32 57344, 57344
      %19 = vsyncadd [#allocation3], %s18
      %s20 = sshll.u32 [#allocation2], 4
      %s21 = int_to_ptr.vmem [resolvable:$true] %s20
      %26 = dma.hbm_to_vmem [thread:$0]  %s1, 57344, %s21, [#allocation3], 512, 512, 32
    $region9: #{net_forward.1} parent=1 // pred_fallthru
      _
    // Predicated region
    $region10: #{net_forward.1} parent=1 // pred_check
      _
    $region11: #{net_forward.1} parent=1 // pred_check_branch
      %28 = sbr.rel (0) target = $region13
    $region12: #{net_forward.1} parent=1 // pred_region
      %s30 = ssub.s32 64, 64
      %31 = vsyncadd [#allocation5], %s30
      %s33 = sshll.u32 [#allocation4], 4
      %s34 = int_to_ptr.vmem [resolvable:$true] %s33
      %36 = dma.hbm_to_vmem [thread:$0]  %s2, 64, %s34, [#allocation5]
    $region13: #{net_forward.1} parent=1 // pred_fallthru
      _
    // Predicated region
    $region14: #{net_forward.1} parent=1 // pred_check
      _
    $region15: #{net_forward.1} parent=1 // pred_check_branch
      %38 = sbr.rel (0) target = $region17
    $region16: #{net_forward.1} parent=1 // pred_region
      %s40 = ssub.s32 8192, 8192
      %41 = vsyncadd [#allocation5], %s40
      %s42 = sshll.u32 [#allocation6], 4
      %s43 = int_to_ptr.vmem [resolvable:$true] %s42
      %48 = dma.hbm_to_vmem [thread:$0]  %s3, 8192, %s43, [#allocation5], 128, 128, 8
    $region17: #{net_forward.1} parent=1 // pred_fallthru
      _
    // Predicated region
    $region18: #{net_forward.1} parent=1 // pred_check
      _
    $region19: #{net_forward.1} parent=1 // pred_check_branch
      %50 = sbr.rel (0) target = $region21
    $region20: #{net_forward.1} parent=1 // pred_region
      %s52 = ssub.s32 16, 16
      %53 = vsyncadd [#allocation8], %s52
      %s55 = sshll.u32 [#allocation7], 4
      %s56 = int_to_ptr.vmem [resolvable:$true] %s55
      %58 = dma.hbm_to_vmem [thread:$0]  %s4, 16, %s56, [#allocation8]
    $region21: #{net_forward.1} parent=1 // pred_fallthru
      _
    // Predicated region
    $region22: #{net_forward.1} parent=1 // pred_check
      _
    $region23: #{net_forward.1} parent=1 // pred_check_branch
      %60 = sbr.rel (0) target = $region25
    $region24: #{net_forward.1} parent=1 // pred_region
      %61 = dma.done [#allocation3], 57344
    $region25: #{net_forward.1} parent=1 // pred_fallthru
      _
    // Predicated region
    $region26: #{net_forward.1} parent=1 // pred_check
      _
    $region27: #{net_forward.1} parent=1 // pred_check_branch
      %63 = sbr.rel (0) target = $region29
    $region28: #{net_forward.1} parent=1 // pred_region
      %64 = dma.done [#allocation5], 64
    $region29: #{net_forward.1} parent=1 // pred_fallthru
      _
    // Predicated region
    $region30: #{net_forward.1} parent=1 // pred_check
      _
    $region31: #{net_forward.1} parent=1 // pred_check_branch
      %66 = sbr.rel (0) target = $region33
    $region32: #{net_forward.1} parent=1 // pred_region
      %67 = dma.done [#allocation5], 8192
    $region33: #{net_forward.1} parent=1 // pred_fallthru
      _
    // Predicated region
    $region34: #{net_forward.1} parent=1 // pred_check
      _
    $region35: #{net_forward.1} parent=1 // pred_check_branch
      %69 = sbr.rel (0) target = $region37
    $region36: #{net_forward.1} parent=1 // pred_region
      %70 = dma.done [#allocation8], 16
    $region37: #{net_forward.1} parent=1 // pred_fallthru
      _
    %v71 = vld [vmem:[%s0] sm:$0xff]
    %v72 = vld [vmem:[%s0 + $0x8] sm:$0xff]
    %v73 = vld [vmem:[%s0 + $0x10] sm:$0xff]
    %v74 = vld [vmem:[%s0 + $0x18] sm:$0xff]
    %v75 = vld [vmem:[%s0 + $0x20] sm:$0xff]
    %v76 = vld [vmem:[%s0 + $0x28] sm:$0xff]
    %v77 = vld [vmem:[%s0 + $0x30] sm:$0xff]
    %v78 = vld [vmem:[#allocation2] sm:$0xff]
    %v79 = vld [vmem:[#allocation2 + $0x8] sm:$0xff]
    %v80 = vld [vmem:[#allocation2 + $0x10] sm:$0xff]
    %v81 = vld [vmem:[#allocation2 + $0x18] sm:$0xff]
    %v82 = vld [vmem:[#allocation2 + $0x20] sm:$0xff]
    %v83 = vld [vmem:[#allocation2 + $0x28] sm:$0xff]
    %v84 = vld [vmem:[#allocation2 + $0x30] sm:$0xff]
    %v85 = vld [vmem:[#allocation2 + $0x38] sm:$0xff]
    %v86 = vld [vmem:[#allocation2 + $0x40] sm:$0xff]
    %v87 = vld [vmem:[#allocation2 + $0x48] sm:$0xff]
    %v88 = vld [vmem:[#allocation2 + $0x50] sm:$0xff]
    %v89 = vld [vmem:[#allocation2 + $0x58] sm:$0xff]
    %v90 = vld [vmem:[#allocation2 + $0x60] sm:$0xff]
    %v91 = vld [vmem:[#allocation2 + $0x68] sm:$0xff]
    %v92 = vld [vmem:[#allocation2 + $0x70] sm:$0xff]
    %v93 = vld [vmem:[#allocation2 + $0x78] sm:$0xff]
    %v94 = vld [vmem:[#allocation2 + $0x80] sm:$0xff]
    %v95 = vld [vmem:[#allocation2 + $0x88] sm:$0xff]
    %v96 = vld [vmem:[#allocation2 + $0x90] sm:$0xff]
    %v97 = vld [vmem:[#allocation2 + $0x98] sm:$0xff]
    %v98 = vld [vmem:[#allocation2 + $0xa0] sm:$0xff]
    %v99 = vld [vmem:[#allocation2 + $0xa8] sm:$0xff]
    %v100 = vld [vmem:[#allocation2 + $0xb0] sm:$0xff]
    %v101 = vld [vmem:[#allocation2 + $0xb8] sm:$0xff]
    %v102 = vld [vmem:[#allocation2 + $0xc0] sm:$0xff]
    %v103 = vld [vmem:[#allocation2 + $0xc8] sm:$0xff]
    %v104 = vld [vmem:[#allocation2 + $0xd0] sm:$0xff]
    %v105 = vld [vmem:[#allocation2 + $0xd8] sm:$0xff]
    %v106 = vld [vmem:[#allocation2 + $0xe0] sm:$0xff]
    %v107 = vld [vmem:[#allocation2 + $0xe8] sm:$0xff]
    %v108 = vld [vmem:[#allocation2 + $0xf0] sm:$0xff]
    %v109 = vld [vmem:[#allocation2 + $0xf8] sm:$0xff]
    %v110 = vld [vmem:[#allocation2 + $0x100] sm:$0xff]
    %v111 = vld [vmem:[#allocation2 + $0x108] sm:$0xff]
    %v112 = vld [vmem:[#allocation2 + $0x110] sm:$0xff]
    %v113 = vld [vmem:[#allocation2 + $0x118] sm:$0xff]
    %v114 = vld [vmem:[#allocation2 + $0x120] sm:$0xff]
    %v115 = vld [vmem:[#allocation2 + $0x128] sm:$0xff]
    %v116 = vld [vmem:[#allocation2 + $0x130] sm:$0xff]
    %v117 = vld [vmem:[#allocation2 + $0x138] sm:$0xff]
    %v118 = vld [vmem:[#allocation2 + $0x140] sm:$0xff]
    %v119 = vld [vmem:[#allocation2 + $0x148] sm:$0xff]
    %v120 = vld [vmem:[#allocation2 + $0x150] sm:$0xff]
    %v121 = vld [vmem:[#allocation2 + $0x158] sm:$0xff]
    %v122 = vld [vmem:[#allocation2 + $0x160] sm:$0xff]
    %v123 = vld [vmem:[#allocation2 + $0x168] sm:$0xff]
    %v124 = vld [vmem:[#allocation2 + $0x170] sm:$0xff]
    %v125 = vld [vmem:[#allocation2 + $0x178] sm:$0xff]
    %v126 = vld [vmem:[#allocation2 + $0x180] sm:$0xff]
    %v127 = vld [vmem:[#allocation2 + $0x188] sm:$0xff]
    %v128 = vld [vmem:[#allocation2 + $0x190] sm:$0xff]
    %v129 = vld [vmem:[#allocation2 + $0x198] sm:$0xff]
    %v130 = vld [vmem:[#allocation2 + $0x1a0] sm:$0xff]
    %v131 = vld [vmem:[#allocation2 + $0x1a8] sm:$0xff]
    %v132 = vld [vmem:[#allocation2 + $0x1b0] sm:$0xff]
    %v133 = vld [vmem:[#allocation2 + $0x1b8] sm:$0xff]
    %v134 = vld [vmem:[#allocation2 + $0x1c0] sm:$0xff]
    %v135 = vld [vmem:[#allocation2 + $0x1c8] sm:$0xff]
    %v136 = vld [vmem:[#allocation2 + $0x1d0] sm:$0xff]
    %v137 = vld [vmem:[#allocation2 + $0x1d8] sm:$0xff]
    %v138 = vld [vmem:[#allocation2 + $0x1e0] sm:$0xff]
    %v139 = vld [vmem:[#allocation2 + $0x1e8] sm:$0xff]
    %v140 = vld [vmem:[#allocation2 + $0x1f0] sm:$0xff]
    %v141 = vld [vmem:[#allocation2 + $0x1f8] sm:$0xff]
    %v142 = vld [vmem:[#allocation2 + $0x200] sm:$0xff]
    %v143 = vld [vmem:[#allocation2 + $0x208] sm:$0xff]
    %v144 = vld [vmem:[#allocation2 + $0x210] sm:$0xff]
    %v145 = vld [vmem:[#allocation2 + $0x218] sm:$0xff]
    %v146 = vld [vmem:[#allocation2 + $0x220] sm:$0xff]
    %v147 = vld [vmem:[#allocation2 + $0x228] sm:$0xff]
    %v148 = vld [vmem:[#allocation2 + $0x230] sm:$0xff]
    %v149 = vld [vmem:[#allocation2 + $0x238] sm:$0xff]
    %v150 = vld [vmem:[#allocation2 + $0x240] sm:$0xff]
    %v151 = vld [vmem:[#allocation2 + $0x248] sm:$0xff]
    %v152 = vld [vmem:[#allocation2 + $0x250] sm:$0xff]
    %v153 = vld [vmem:[#allocation2 + $0x258] sm:$0xff]
    %v154 = vld [vmem:[#allocation2 + $0x260] sm:$0xff]
    %v155 = vld [vmem:[#allocation2 + $0x268] sm:$0xff]
    %v156 = vld [vmem:[#allocation2 + $0x270] sm:$0xff]
    %v157 = vld [vmem:[#allocation2 + $0x278] sm:$0xff]
    %v158 = vld [vmem:[#allocation2 + $0x280] sm:$0xff]
    %v159 = vld [vmem:[#allocation2 + $0x288] sm:$0xff]
    %v160 = vld [vmem:[#allocation2 + $0x290] sm:$0xff]
    %v161 = vld [vmem:[#allocation2 + $0x298] sm:$0xff]
    %v162 = vld [vmem:[#allocation2 + $0x2a0] sm:$0xff]
    %v163 = vld [vmem:[#allocation2 + $0x2a8] sm:$0xff]
    %v164 = vld [vmem:[#allocation2 + $0x2b0] sm:$0xff]
    %v165 = vld [vmem:[#allocation2 + $0x2b8] sm:$0xff]
    %v166 = vld [vmem:[#allocation2 + $0x2c0] sm:$0xff]
    %v167 = vld [vmem:[#allocation2 + $0x2c8] sm:$0xff]
    %v168 = vld [vmem:[#allocation2 + $0x2d0] sm:$0xff]
    %v169 = vld [vmem:[#allocation2 + $0x2d8] sm:$0xff]
    %v170 = vld [vmem:[#allocation2 + $0x2e0] sm:$0xff]
    %v171 = vld [vmem:[#allocation2 + $0x2e8] sm:$0xff]
    %v172 = vld [vmem:[#allocation2 + $0x2f0] sm:$0xff]
    %v173 = vld [vmem:[#allocation2 + $0x2f8] sm:$0xff]
    %v174 = vld [vmem:[#allocation2 + $0x300] sm:$0xff]
    %v175 = vld [vmem:[#allocation2 + $0x308] sm:$0xff]
    %v176 = vld [vmem:[#allocation2 + $0x310] sm:$0xff]
    %v177 = vld [vmem:[#allocation2 + $0x318] sm:$0xff]
    %v178 = vld [vmem:[#allocation2 + $0x320] sm:$0xff]
    %v179 = vld [vmem:[#allocation2 + $0x328] sm:$0xff]
    %v180 = vld [vmem:[#allocation2 + $0x330] sm:$0xff]
    %v181 = vld [vmem:[#allocation2 + $0x338] sm:$0xff]
    %v182 = vld [vmem:[#allocation2 + $0x340] sm:$0xff]
    %v183 = vld [vmem:[#allocation2 + $0x348] sm:$0xff]
    %v184 = vld [vmem:[#allocation2 + $0x350] sm:$0xff]
    %v185 = vld [vmem:[#allocation2 + $0x358] sm:$0xff]
    %v186 = vld [vmem:[#allocation2 + $0x360] sm:$0xff]
    %v187 = vld [vmem:[#allocation2 + $0x368] sm:$0xff]
    %v188 = vld [vmem:[#allocation2 + $0x370] sm:$0xff]
    %v189 = vld [vmem:[#allocation2 + $0x378] sm:$0xff]
    %v190 = vld [vmem:[#allocation2 + $0x380] sm:$0xff]
    %v191 = vld [vmem:[#allocation2 + $0x388] sm:$0xff]
    %v192 = vld [vmem:[#allocation2 + $0x390] sm:$0xff]
    %v193 = vld [vmem:[#allocation2 + $0x398] sm:$0xff]
    %v194 = vld [vmem:[#allocation2 + $0x3a0] sm:$0xff]
    %v195 = vld [vmem:[#allocation2 + $0x3a8] sm:$0xff]
    %v196 = vld [vmem:[#allocation2 + $0x3b0] sm:$0xff]
    %v197 = vld [vmem:[#allocation2 + $0x3b8] sm:$0xff]
    %v198 = vld [vmem:[#allocation2 + $0x3c0] sm:$0xff]
    %v199 = vld [vmem:[#allocation2 + $0x3c8] sm:$0xff]
    %v200 = vld [vmem:[#allocation2 + $0x3d0] sm:$0xff]
    %v201 = vld [vmem:[#allocation2 + $0x3d8] sm:$0xff]
    %v202 = vld [vmem:[#allocation2 + $0x3e0] sm:$0xff]
    %v203 = vld [vmem:[#allocation2 + $0x3e8] sm:$0xff]
    %v204 = vld [vmem:[#allocation2 + $0x3f0] sm:$0xff]
    %v205 = vld [vmem:[#allocation2 + $0x3f8] sm:$0xff]
    %v206 = vld [vmem:[#allocation2 + $0x400] sm:$0xff]
    %v207 = vld [vmem:[#allocation2 + $0x408] sm:$0xff]
    %v208 = vld [vmem:[#allocation2 + $0x410] sm:$0xff]
    %v209 = vld [vmem:[#allocation2 + $0x418] sm:$0xff]
    %v210 = vld [vmem:[#allocation2 + $0x420] sm:$0xff]
    %v211 = vld [vmem:[#allocation2 + $0x428] sm:$0xff]
    %v212 = vld [vmem:[#allocation2 + $0x430] sm:$0xff]
    %v213 = vld [vmem:[#allocation2 + $0x438] sm:$0xff]
    %v214 = vld [vmem:[#allocation2 + $0x440] sm:$0xff]
    %v215 = vld [vmem:[#allocation2 + $0x448] sm:$0xff]
    %v216 = vld [vmem:[#allocation2 + $0x450] sm:$0xff]
    %v217 = vld [vmem:[#allocation2 + $0x458] sm:$0xff]
    %v218 = vld [vmem:[#allocation2 + $0x460] sm:$0xff]
    %v219 = vld [vmem:[#allocation2 + $0x468] sm:$0xff]
    %v220 = vld [vmem:[#allocation2 + $0x470] sm:$0xff]
    %v221 = vld [vmem:[#allocation2 + $0x478] sm:$0xff]
    %v222 = vld [vmem:[#allocation2 + $0x480] sm:$0xff]
    %v223 = vld [vmem:[#allocation2 + $0x488] sm:$0xff]
    %v224 = vld [vmem:[#allocation2 + $0x490] sm:$0xff]
    %v225 = vld [vmem:[#allocation2 + $0x498] sm:$0xff]
    %v226 = vld [vmem:[#allocation2 + $0x4a0] sm:$0xff]
    %v227 = vld [vmem:[#allocation2 + $0x4a8] sm:$0xff]
    %v228 = vld [vmem:[#allocation2 + $0x4b0] sm:$0xff]
    %v229 = vld [vmem:[#allocation2 + $0x4b8] sm:$0xff]
    %v230 = vld [vmem:[#allocation2 + $0x4c0] sm:$0xff]
    %v231 = vld [vmem:[#allocation2 + $0x4c8] sm:$0xff]
    %v232 = vld [vmem:[#allocation2 + $0x4d0] sm:$0xff]
    %v233 = vld [vmem:[#allocation2 + $0x4d8] sm:$0xff]
    %v234 = vld [vmem:[#allocation2 + $0x4e0] sm:$0xff]
    %v235 = vld [vmem:[#allocation2 + $0x4e8] sm:$0xff]
    %v236 = vld [vmem:[#allocation2 + $0x4f0] sm:$0xff]
    %v237 = vld [vmem:[#allocation2 + $0x4f8] sm:$0xff]
    %v238 = vld [vmem:[#allocation2 + $0x500] sm:$0xff]
    %v239 = vld [vmem:[#allocation2 + $0x508] sm:$0xff]
    %v240 = vld [vmem:[#allocation2 + $0x510] sm:$0xff]
    %v241 = vld [vmem:[#allocation2 + $0x518] sm:$0xff]
    %v242 = vld [vmem:[#allocation2 + $0x520] sm:$0xff]
    %v243 = vld [vmem:[#allocation2 + $0x528] sm:$0xff]
    %v244 = vld [vmem:[#allocation2 + $0x530] sm:$0xff]
    %v245 = vld [vmem:[#allocation2 + $0x538] sm:$0xff]
    %v246 = vld [vmem:[#allocation2 + $0x540] sm:$0xff]
    %v247 = vld [vmem:[#allocation2 + $0x548] sm:$0xff]
    %v248 = vld [vmem:[#allocation2 + $0x550] sm:$0xff]
    %v249 = vld [vmem:[#allocation2 + $0x558] sm:$0xff]
    %v250 = vld [vmem:[#allocation2 + $0x560] sm:$0xff]
    %v251 = vld [vmem:[#allocation2 + $0x568] sm:$0xff]
    %v252 = vld [vmem:[#allocation2 + $0x570] sm:$0xff]
    %v253 = vld [vmem:[#allocation2 + $0x578] sm:$0xff]
    %v254 = vld [vmem:[#allocation2 + $0x580] sm:$0xff]
    %v255 = vld [vmem:[#allocation2 + $0x588] sm:$0xff]
    %v256 = vld [vmem:[#allocation2 + $0x590] sm:$0xff]
    %v257 = vld [vmem:[#allocation2 + $0x598] sm:$0xff]
    %v258 = vld [vmem:[#allocation2 + $0x5a0] sm:$0xff]
    %v259 = vld [vmem:[#allocation2 + $0x5a8] sm:$0xff]
    %v260 = vld [vmem:[#allocation2 + $0x5b0] sm:$0xff]
    %v261 = vld [vmem:[#allocation2 + $0x5b8] sm:$0xff]
    %v262 = vld [vmem:[#allocation2 + $0x5c0] sm:$0xff]
    %v263 = vld [vmem:[#allocation2 + $0x5c8] sm:$0xff]
    %v264 = vld [vmem:[#allocation2 + $0x5d0] sm:$0xff]
    %v265 = vld [vmem:[#allocation2 + $0x5d8] sm:$0xff]
    %v266 = vld [vmem:[#allocation2 + $0x5e0] sm:$0xff]
    %v267 = vld [vmem:[#allocation2 + $0x5e8] sm:$0xff]
    %v268 = vld [vmem:[#allocation2 + $0x5f0] sm:$0xff]
    %v269 = vld [vmem:[#allocation2 + $0x5f8] sm:$0xff]
    %v270 = vld [vmem:[#allocation2 + $0x600] sm:$0xff]
    %v271 = vld [vmem:[#allocation2 + $0x608] sm:$0xff]
    %v272 = vld [vmem:[#allocation2 + $0x610] sm:$0xff]
    %v273 = vld [vmem:[#allocation2 + $0x618] sm:$0xff]
    %v274 = vld [vmem:[#allocation2 + $0x620] sm:$0xff]
    %v275 = vld [vmem:[#allocation2 + $0x628] sm:$0xff]
    %v276 = vld [vmem:[#allocation2 + $0x630] sm:$0xff]
    %v277 = vld [vmem:[#allocation2 + $0x638] sm:$0xff]
    %v278 = vld [vmem:[#allocation2 + $0x640] sm:$0xff]
    %v279 = vld [vmem:[#allocation2 + $0x648] sm:$0xff]
    %v280 = vld [vmem:[#allocation2 + $0x650] sm:$0xff]
    %v281 = vld [vmem:[#allocation2 + $0x658] sm:$0xff]
    %v282 = vld [vmem:[#allocation2 + $0x660] sm:$0xff]
    %v283 = vld [vmem:[#allocation2 + $0x668] sm:$0xff]
    %v284 = vld [vmem:[#allocation2 + $0x670] sm:$0xff]
    %v285 = vld [vmem:[#allocation2 + $0x678] sm:$0xff]
    %v286 = vld [vmem:[#allocation2 + $0x680] sm:$0xff]
    %v287 = vld [vmem:[#allocation2 + $0x688] sm:$0xff]
    %v288 = vld [vmem:[#allocation2 + $0x690] sm:$0xff]
    %v289 = vld [vmem:[#allocation2 + $0x698] sm:$0xff]
    %v290 = vld [vmem:[#allocation2 + $0x6a0] sm:$0xff]
    %v291 = vld [vmem:[#allocation2 + $0x6a8] sm:$0xff]
    %v292 = vld [vmem:[#allocation2 + $0x6b0] sm:$0xff]
    %v293 = vld [vmem:[#allocation2 + $0x6b8] sm:$0xff]
    %v294 = vld [vmem:[#allocation2 + $0x6c0] sm:$0xff]
    %v295 = vld [vmem:[#allocation2 + $0x6c8] sm:$0xff]
    %v296 = vld [vmem:[#allocation2 + $0x6d0] sm:$0xff]
    %v297 = vld [vmem:[#allocation2 + $0x6d8] sm:$0xff]
    %v298 = vld [vmem:[#allocation2 + $0x6e0] sm:$0xff]
    %v299 = vld [vmem:[#allocation2 + $0x6e8] sm:$0xff]
    %v300 = vld [vmem:[#allocation2 + $0x6f0] sm:$0xff]
    %v301 = vld [vmem:[#allocation2 + $0x6f8] sm:$0xff]
    %v302 = vld [vmem:[#allocation2 + $0x700] sm:$0xff]
    %v303 = vld [vmem:[#allocation2 + $0x708] sm:$0xff]
    %v304 = vld [vmem:[#allocation2 + $0x710] sm:$0xff]
    %v305 = vld [vmem:[#allocation2 + $0x718] sm:$0xff]
    %v306 = vld [vmem:[#allocation2 + $0x720] sm:$0xff]
    %v307 = vld [vmem:[#allocation2 + $0x728] sm:$0xff]
    %v308 = vld [vmem:[#allocation2 + $0x730] sm:$0xff]
    %v309 = vld [vmem:[#allocation2 + $0x738] sm:$0xff]
    %v310 = vld [vmem:[#allocation2 + $0x740] sm:$0xff]
    %v311 = vld [vmem:[#allocation2 + $0x748] sm:$0xff]
    %v312 = vld [vmem:[#allocation2 + $0x750] sm:$0xff]
    %v313 = vld [vmem:[#allocation2 + $0x758] sm:$0xff]
    %v314 = vld [vmem:[#allocation2 + $0x760] sm:$0xff]
    %v315 = vld [vmem:[#allocation2 + $0x768] sm:$0xff]
    %v316 = vld [vmem:[#allocation2 + $0x770] sm:$0xff]
    %v317 = vld [vmem:[#allocation2 + $0x778] sm:$0xff]
    %v318 = vld [vmem:[#allocation2 + $0x780] sm:$0xff]
    %v319 = vld [vmem:[#allocation2 + $0x788] sm:$0xff]
    %v320 = vld [vmem:[#allocation2 + $0x790] sm:$0xff]
    %v321 = vld [vmem:[#allocation2 + $0x798] sm:$0xff]
    %v322 = vld [vmem:[#allocation2 + $0x7a0] sm:$0xff]
    %v323 = vld [vmem:[#allocation2 + $0x7a8] sm:$0xff]
    %v324 = vld [vmem:[#allocation2 + $0x7b0] sm:$0xff]
    %v325 = vld [vmem:[#allocation2 + $0x7b8] sm:$0xff]
    %v326 = vld [vmem:[#allocation2 + $0x7c0] sm:$0xff]
    %v327 = vld [vmem:[#allocation2 + $0x7c8] sm:$0xff]
    %v328 = vld [vmem:[#allocation2 + $0x7d0] sm:$0xff]
    %v329 = vld [vmem:[#allocation2 + $0x7d8] sm:$0xff]
    %v330 = vld [vmem:[#allocation2 + $0x7e0] sm:$0xff]
    %v331 = vld [vmem:[#allocation2 + $0x7e8] sm:$0xff]
    %v332 = vld [vmem:[#allocation2 + $0x7f0] sm:$0xff]
    %v333 = vld [vmem:[#allocation2 + $0x7f8] sm:$0xff]
    %v334 = vld [vmem:[#allocation2 + $0x800] sm:$0xff]
    %v335 = vld [vmem:[#allocation2 + $0x808] sm:$0xff]
    %v336 = vld [vmem:[#allocation2 + $0x810] sm:$0xff]
    %v337 = vld [vmem:[#allocation2 + $0x818] sm:$0xff]
    %v338 = vld [vmem:[#allocation2 + $0x820] sm:$0xff]
    %v339 = vld [vmem:[#allocation2 + $0x828] sm:$0xff]
    %v340 = vld [vmem:[#allocation2 + $0x830] sm:$0xff]
    %v341 = vld [vmem:[#allocation2 + $0x838] sm:$0xff]
    %v342 = vld [vmem:[#allocation2 + $0x840] sm:$0xff]
    %v343 = vld [vmem:[#allocation2 + $0x848] sm:$0xff]
    %v344 = vld [vmem:[#allocation2 + $0x850] sm:$0xff]
    %v345 = vld [vmem:[#allocation2 + $0x858] sm:$0xff]
    %v346 = vld [vmem:[#allocation2 + $0x860] sm:$0xff]
    %v347 = vld [vmem:[#allocation2 + $0x868] sm:$0xff]
    %v348 = vld [vmem:[#allocation2 + $0x870] sm:$0xff]
    %v349 = vld [vmem:[#allocation2 + $0x878] sm:$0xff]
    %v350 = vld [vmem:[#allocation2 + $0x880] sm:$0xff]
    %v351 = vld [vmem:[#allocation2 + $0x888] sm:$0xff]
    %v352 = vld [vmem:[#allocation2 + $0x890] sm:$0xff]
    %v353 = vld [vmem:[#allocation2 + $0x898] sm:$0xff]
    %v354 = vld [vmem:[#allocation2 + $0x8a0] sm:$0xff]
    %v355 = vld [vmem:[#allocation2 + $0x8a8] sm:$0xff]
    %v356 = vld [vmem:[#allocation2 + $0x8b0] sm:$0xff]
    %v357 = vld [vmem:[#allocation2 + $0x8b8] sm:$0xff]
    %v358 = vld [vmem:[#allocation2 + $0x8c0] sm:$0xff]
    %v359 = vld [vmem:[#allocation2 + $0x8c8] sm:$0xff]
    %v360 = vld [vmem:[#allocation2 + $0x8d0] sm:$0xff]
    %v361 = vld [vmem:[#allocation2 + $0x8d8] sm:$0xff]
    %v362 = vld [vmem:[#allocation2 + $0x8e0] sm:$0xff]
    %v363 = vld [vmem:[#allocation2 + $0x8e8] sm:$0xff]
    %v364 = vld [vmem:[#allocation2 + $0x8f0] sm:$0xff]
    %v365 = vld [vmem:[#allocation2 + $0x8f8] sm:$0xff]
    %v366 = vld [vmem:[#allocation2 + $0x900] sm:$0xff]
    %v367 = vld [vmem:[#allocation2 + $0x908] sm:$0xff]
    %v368 = vld [vmem:[#allocation2 + $0x910] sm:$0xff]
    %v369 = vld [vmem:[#allocation2 + $0x918] sm:$0xff]
    %v370 = vld [vmem:[#allocation2 + $0x920] sm:$0xff]
    %v371 = vld [vmem:[#allocation2 + $0x928] sm:$0xff]
    %v372 = vld [vmem:[#allocation2 + $0x930] sm:$0xff]
    %v373 = vld [vmem:[#allocation2 + $0x938] sm:$0xff]
    %v374 = vld [vmem:[#allocation2 + $0x940] sm:$0xff]
    %v375 = vld [vmem:[#allocation2 + $0x948] sm:$0xff]
    %v376 = vld [vmem:[#allocation2 + $0x950] sm:$0xff]
    %v377 = vld [vmem:[#allocation2 + $0x958] sm:$0xff]
    %v378 = vld [vmem:[#allocation2 + $0x960] sm:$0xff]
    %v379 = vld [vmem:[#allocation2 + $0x968] sm:$0xff]
    %v380 = vld [vmem:[#allocation2 + $0x970] sm:$0xff]
    %v381 = vld [vmem:[#allocation2 + $0x978] sm:$0xff]
    %v382 = vld [vmem:[#allocation2 + $0x980] sm:$0xff]
    %v383 = vld [vmem:[#allocation2 + $0x988] sm:$0xff]
    %v384 = vld [vmem:[#allocation2 + $0x990] sm:$0xff]
    %v385 = vld [vmem:[#allocation2 + $0x998] sm:$0xff]
    %v386 = vld [vmem:[#allocation2 + $0x9a0] sm:$0xff]
    %v387 = vld [vmem:[#allocation2 + $0x9a8] sm:$0xff]
    %v388 = vld [vmem:[#allocation2 + $0x9b0] sm:$0xff]
    %v389 = vld [vmem:[#allocation2 + $0x9b8] sm:$0xff]
    %v390 = vld [vmem:[#allocation2 + $0x9c0] sm:$0xff]
    %v391 = vld [vmem:[#allocation2 + $0x9c8] sm:$0xff]
    %v392 = vld [vmem:[#allocation2 + $0x9d0] sm:$0xff]
    %v393 = vld [vmem:[#allocation2 + $0x9d8] sm:$0xff]
    %v394 = vld [vmem:[#allocation2 + $0x9e0] sm:$0xff]
    %v395 = vld [vmem:[#allocation2 + $0x9e8] sm:$0xff]
    %v396 = vld [vmem:[#allocation2 + $0x9f0] sm:$0xff]
    %v397 = vld [vmem:[#allocation2 + $0x9f8] sm:$0xff]
    %v398 = vld [vmem:[#allocation2 + $0xa00] sm:$0xff]
    %v399 = vld [vmem:[#allocation2 + $0xa08] sm:$0xff]
    %v400 = vld [vmem:[#allocation2 + $0xa10] sm:$0xff]
    %v401 = vld [vmem:[#allocation2 + $0xa18] sm:$0xff]
    %v402 = vld [vmem:[#allocation2 + $0xa20] sm:$0xff]
    %v403 = vld [vmem:[#allocation2 + $0xa28] sm:$0xff]
    %v404 = vld [vmem:[#allocation2 + $0xa30] sm:$0xff]
    %v405 = vld [vmem:[#allocation2 + $0xa38] sm:$0xff]
    %v406 = vld [vmem:[#allocation2 + $0xa40] sm:$0xff]
    %v407 = vld [vmem:[#allocation2 + $0xa48] sm:$0xff]
    %v408 = vld [vmem:[#allocation2 + $0xa50] sm:$0xff]
    %v409 = vld [vmem:[#allocation2 + $0xa58] sm:$0xff]
    %v410 = vld [vmem:[#allocation2 + $0xa60] sm:$0xff]
    %v411 = vld [vmem:[#allocation2 + $0xa68] sm:$0xff]
    %v412 = vld [vmem:[#allocation2 + $0xa70] sm:$0xff]
    %v413 = vld [vmem:[#allocation2 + $0xa78] sm:$0xff]
    %v414 = vld [vmem:[#allocation2 + $0xa80] sm:$0xff]
    %v415 = vld [vmem:[#allocation2 + $0xa88] sm:$0xff]
    %v416 = vld [vmem:[#allocation2 + $0xa90] sm:$0xff]
    %v417 = vld [vmem:[#allocation2 + $0xa98] sm:$0xff]
    %v418 = vld [vmem:[#allocation2 + $0xaa0] sm:$0xff]
    %v419 = vld [vmem:[#allocation2 + $0xaa8] sm:$0xff]
    %v420 = vld [vmem:[#allocation2 + $0xab0] sm:$0xff]
    %v421 = vld [vmem:[#allocation2 + $0xab8] sm:$0xff]
    %v422 = vld [vmem:[#allocation2 + $0xac0] sm:$0xff]
    %v423 = vld [vmem:[#allocation2 + $0xac8] sm:$0xff]
    %v424 = vld [vmem:[#allocation2 + $0xad0] sm:$0xff]
    %v425 = vld [vmem:[#allocation2 + $0xad8] sm:$0xff]
    %v426 = vld [vmem:[#allocation2 + $0xae0] sm:$0xff]
    %v427 = vld [vmem:[#allocation2 + $0xae8] sm:$0xff]
    %v428 = vld [vmem:[#allocation2 + $0xaf0] sm:$0xff]
    %v429 = vld [vmem:[#allocation2 + $0xaf8] sm:$0xff]
    %v430 = vld [vmem:[#allocation2 + $0xb00] sm:$0xff]
    %v431 = vld [vmem:[#allocation2 + $0xb08] sm:$0xff]
    %v432 = vld [vmem:[#allocation2 + $0xb10] sm:$0xff]
    %v433 = vld [vmem:[#allocation2 + $0xb18] sm:$0xff]
    %v434 = vld [vmem:[#allocation2 + $0xb20] sm:$0xff]
    %v435 = vld [vmem:[#allocation2 + $0xb28] sm:$0xff]
    %v436 = vld [vmem:[#allocation2 + $0xb30] sm:$0xff]
    %v437 = vld [vmem:[#allocation2 + $0xb38] sm:$0xff]
    %v438 = vld [vmem:[#allocation2 + $0xb40] sm:$0xff]
    %v439 = vld [vmem:[#allocation2 + $0xb48] sm:$0xff]
    %v440 = vld [vmem:[#allocation2 + $0xb50] sm:$0xff]
    %v441 = vld [vmem:[#allocation2 + $0xb58] sm:$0xff]
    %v442 = vld [vmem:[#allocation2 + $0xb60] sm:$0xff]
    %v443 = vld [vmem:[#allocation2 + $0xb68] sm:$0xff]
    %v444 = vld [vmem:[#allocation2 + $0xb70] sm:$0xff]
    %v445 = vld [vmem:[#allocation2 + $0xb78] sm:$0xff]
    %v446 = vld [vmem:[#allocation2 + $0xb80] sm:$0xff]
    %v447 = vld [vmem:[#allocation2 + $0xb88] sm:$0xff]
    %v448 = vld [vmem:[#allocation2 + $0xb90] sm:$0xff]
    %v449 = vld [vmem:[#allocation2 + $0xb98] sm:$0xff]
    %v450 = vld [vmem:[#allocation2 + $0xba0] sm:$0xff]
    %v451 = vld [vmem:[#allocation2 + $0xba8] sm:$0xff]
    %v452 = vld [vmem:[#allocation2 + $0xbb0] sm:$0xff]
    %v453 = vld [vmem:[#allocation2 + $0xbb8] sm:$0xff]
    %v454 = vld [vmem:[#allocation2 + $0xbc0] sm:$0xff]
    %v455 = vld [vmem:[#allocation2 + $0xbc8] sm:$0xff]
    %v456 = vld [vmem:[#allocation2 + $0xbd0] sm:$0xff]
    %v457 = vld [vmem:[#allocation2 + $0xbd8] sm:$0xff]
    %v458 = vld [vmem:[#allocation2 + $0xbe0] sm:$0xff]
    %v459 = vld [vmem:[#allocation2 + $0xbe8] sm:$0xff]
    %v460 = vld [vmem:[#allocation2 + $0xbf0] sm:$0xff]
    %v461 = vld [vmem:[#allocation2 + $0xbf8] sm:$0xff]
    %v462 = vld [vmem:[#allocation2 + $0xc00] sm:$0xff]
    %v463 = vld [vmem:[#allocation2 + $0xc08] sm:$0xff]
    %v464 = vld [vmem:[#allocation2 + $0xc10] sm:$0xff]
    %v465 = vld [vmem:[#allocation2 + $0xc18] sm:$0xff]
    %v466 = vld [vmem:[#allocation2 + $0xc20] sm:$0xff]
    %v467 = vld [vmem:[#allocation2 + $0xc28] sm:$0xff]
    %v468 = vld [vmem:[#allocation2 + $0xc30] sm:$0xff]
    %v469 = vld [vmem:[#allocation2 + $0xc38] sm:$0xff]
    %v470 = vld [vmem:[#allocation2 + $0xc40] sm:$0xff]
    %v471 = vld [vmem:[#allocation2 + $0xc48] sm:$0xff]
    %v472 = vld [vmem:[#allocation2 + $0xc50] sm:$0xff]
    %v473 = vld [vmem:[#allocation2 + $0xc58] sm:$0xff]
    %v474 = vld [vmem:[#allocation2 + $0xc60] sm:$0xff]
    %v475 = vld [vmem:[#allocation2 + $0xc68] sm:$0xff]
    %v476 = vld [vmem:[#allocation2 + $0xc70] sm:$0xff]
    %v477 = vld [vmem:[#allocation2 + $0xc78] sm:$0xff]
    %v478 = vld [vmem:[#allocation2 + $0xc80] sm:$0xff]
    %v479 = vld [vmem:[#allocation2 + $0xc88] sm:$0xff]
    %v480 = vld [vmem:[#allocation2 + $0xc90] sm:$0xff]
    %v481 = vld [vmem:[#allocation2 + $0xc98] sm:$0xff]
    %v482 = vld [vmem:[#allocation2 + $0xca0] sm:$0xff]
    %v483 = vld [vmem:[#allocation2 + $0xca8] sm:$0xff]
    %v484 = vld [vmem:[#allocation2 + $0xcb0] sm:$0xff]
    %v485 = vld [vmem:[#allocation2 + $0xcb8] sm:$0xff]
    %v486 = vld [vmem:[#allocation2 + $0xcc0] sm:$0xff]
    %v487 = vld [vmem:[#allocation2 + $0xcc8] sm:$0xff]
    %v488 = vld [vmem:[#allocation2 + $0xcd0] sm:$0xff]
    %v489 = vld [vmem:[#allocation2 + $0xcd8] sm:$0xff]
    %v490 = vld [vmem:[#allocation2 + $0xce0] sm:$0xff]
    %v491 = vld [vmem:[#allocation2 + $0xce8] sm:$0xff]
    %v492 = vld [vmem:[#allocation2 + $0xcf0] sm:$0xff]
    %v493 = vld [vmem:[#allocation2 + $0xcf8] sm:$0xff]
    %v494 = vld [vmem:[#allocation2 + $0xd00] sm:$0xff]
    %v495 = vld [vmem:[#allocation2 + $0xd08] sm:$0xff]
    %v496 = vld [vmem:[#allocation2 + $0xd10] sm:$0xff]
    %v497 = vld [vmem:[#allocation2 + $0xd18] sm:$0xff]
    %v498 = vld [vmem:[#allocation2 + $0xd20] sm:$0xff]
    %v499 = vld [vmem:[#allocation2 + $0xd28] sm:$0xff]
    %v500 = vld [vmem:[#allocation2 + $0xd30] sm:$0xff]
    %v501 = vld [vmem:[#allocation2 + $0xd38] sm:$0xff]
    %v502 = vld [vmem:[#allocation2 + $0xd40] sm:$0xff]
    %v503 = vld [vmem:[#allocation2 + $0xd48] sm:$0xff]
    %v504 = vld [vmem:[#allocation2 + $0xd50] sm:$0xff]
    %v505 = vld [vmem:[#allocation2 + $0xd58] sm:$0xff]
    %v506 = vld [vmem:[#allocation2 + $0xd60] sm:$0xff]
    %v507 = vld [vmem:[#allocation2 + $0xd68] sm:$0xff]
    %v508 = vld [vmem:[#allocation2 + $0xd70] sm:$0xff]
    %v509 = vld [vmem:[#allocation2 + $0xd78] sm:$0xff]
    %v510 = vld [vmem:[#allocation2 + $0xd80] sm:$0xff]
    %v511 = vld [vmem:[#allocation2 + $0xd88] sm:$0xff]
    %v512 = vld [vmem:[#allocation2 + $0xd90] sm:$0xff]
    %v513 = vld [vmem:[#allocation2 + $0xd98] sm:$0xff]
    %v514 = vld [vmem:[#allocation2 + $0xda0] sm:$0xff]
    %v515 = vld [vmem:[#allocation2 + $0xda8] sm:$0xff]
    %v516 = vld [vmem:[#allocation2 + $0xdb0] sm:$0xff]
    %v517 = vld [vmem:[#allocation2 + $0xdb8] sm:$0xff]
    %v518 = vld [vmem:[#allocation2 + $0xdc0] sm:$0xff]
    %v519 = vld [vmem:[#allocation2 + $0xdc8] sm:$0xff]
    %v520 = vld [vmem:[#allocation2 + $0xdd0] sm:$0xff]
    %v521 = vld [vmem:[#allocation2 + $0xdd8] sm:$0xff]
    %v522 = vld [vmem:[#allocation2 + $0xde0] sm:$0xff]
    %v523 = vld [vmem:[#allocation2 + $0xde8] sm:$0xff]
    %v524 = vld [vmem:[#allocation2 + $0xdf0] sm:$0xff]
    %v525 = vld [vmem:[#allocation2 + $0xdf8] sm:$0xff]
    %v526 = vld [vmem:[#allocation4] sm:$0xf]
    %v528 = vlaneseq
    %v529 = vshrl.u32 %v528, 7
    %v530 = vsub.s32 0, %v529
    %v531 = vrot.slane %v526, %v530
    %v532 = vlaneseq
    %v533 = vshrl.u32 %v532, 7
    %v534 = vsub.s32 1, %v533
    %v535 = vrot.slane %v526, %v534
    %v536 = vlaneseq
    %v537 = vshrl.u32 %v536, 7
    %v538 = vsub.s32 2, %v537
    %v539 = vrot.slane %v526, %v538
    %v540 = vlaneseq
    %v541 = vshrl.u32 %v540, 7
    %v542 = vsub.s32 3, %v541
    %v543 = vrot.slane %v526, %v542
    %548 = vmatprep.subr.mxu0 %v79
    %549 = vmatpush1.msra.mxu0 %v78
    %550 = vmatprep.subr.mxu0 %v83
    %551 = vmatpush1.msra.mxu0 %v82
    %552 = vmatprep.subr.mxu0 %v87
    %553 = vmatpush1.msra.mxu0 %v86
    %554 = vmatprep.subr.mxu0 %v91
    %555 = vmatpush1.msra.mxu0 %v90
    %556 = vmatprep.subr.mxu0 %v95
    %557 = vmatpush1.msra.mxu0 %v94
    %558 = vmatprep.subr.mxu0 %v99
    %559 = vmatpush1.msra.mxu0 %v98
    %560 = vmatprep.subr.mxu0 %v103
    %561 = vmatpush1.msra.mxu0 %v102
    %562 = vmatprep.subr.mxu0 %v107
    %563 = vmatpush1.msra.mxu0 %v106
    %564 = vmatprep.subr.mxu0 %v111
    %565 = vmatpush1.msra.mxu0 %v110
    %566 = vmatprep.subr.mxu0 %v115
    %567 = vmatpush1.msra.mxu0 %v114
    %568 = vmatprep.subr.mxu0 %v119
    %569 = vmatpush1.msra.mxu0 %v118
    %570 = vmatprep.subr.mxu0 %v123
    %571 = vmatpush1.msra.mxu0 %v122
    %572 = vmatprep.subr.mxu0 %v127
    %573 = vmatpush1.msra.mxu0 %v126
    %574 = vmatprep.subr.mxu0 %v131
    %575 = vmatpush1.msra.mxu0 %v130
    %576 = vmatprep.subr.mxu0 %v135
    %577 = vmatpush1.msra.mxu0 %v134
    %578 = vmatprep.subr.mxu0 %v139
    %579 = vmatpush1.msra.mxu0 %v138
    %580 = vmatprep.subr.mxu0 %v143
    %581 = vmatpush1.msra.mxu0 %v142
    %582 = vmatprep.subr.mxu0 %v147
    %583 = vmatpush1.msra.mxu0 %v146
    %584 = vmatprep.subr.mxu0 %v151
    %585 = vmatpush1.msra.mxu0 %v150
    %586 = vmatprep.subr.mxu0 %v155
    %587 = vmatpush1.msra.mxu0 %v154
    %588 = vmatprep.subr.mxu0 %v159
    %589 = vmatpush1.msra.mxu0 %v158
    %590 = vmatprep.subr.mxu0 %v163
    %591 = vmatpush1.msra.mxu0 %v162
    %592 = vmatprep.subr.mxu0 %v167
    %593 = vmatpush1.msra.mxu0 %v166
    %594 = vmatprep.subr.mxu0 %v171
    %595 = vmatpush1.msra.mxu0 %v170
    %596 = vmatprep.subr.mxu0 %v175
    %597 = vmatpush1.msra.mxu0 %v174
    %598 = vmatprep.subr.mxu0 %v179
    %599 = vmatpush1.msra.mxu0 %v178
    %600 = vmatprep.subr.mxu0 %v183
    %601 = vmatpush1.msra.mxu0 %v182
    %602 = vmatprep.subr.mxu0 %v187
    %603 = vmatpush1.msra.mxu0 %v186
    %604 = vmatprep.subr.mxu0 %v191
    %605 = vmatpush1.msra.mxu0 %v190
    %606 = vmatprep.subr.mxu0 %v195
    %607 = vmatpush1.msra.mxu0 %v194
    %608 = vmatprep.subr.mxu0 %v199
    %609 = vmatpush1.msra.mxu0 %v198
    %610 = vmatprep.subr.mxu0 %v203
    %611 = vmatpush1.msra.mxu0 %v202
    %612 = vmatprep.mubr.f32.mxu0 %v72
    %613 = vmatmul.mubr.f32.gmra.mrb[0].mxu0 %v71
    %v614 = vpop.f32.mrb[0].mxu0
    %v615 = vadd.f32 %v531, %v614
    %v616 = vpop.f32.mrb[0].mxu0
    %v617 = vadd.f32 %v535, %v616
    %618 = vdwg.mxu0
    %619 = vmatprep.subr.mxu0 %v207
    %620 = vmatpush1.msra.mxu0 %v206
    %621 = vmatprep.subr.mxu0 %v211
    %622 = vmatpush1.msra.mxu0 %v210
    %623 = vmatprep.subr.mxu0 %v215
    %624 = vmatpush1.msra.mxu0 %v214
    %625 = vmatprep.subr.mxu0 %v219
    %626 = vmatpush1.msra.mxu0 %v218
    %627 = vmatprep.subr.mxu0 %v223
    %628 = vmatpush1.msra.mxu0 %v222
    %629 = vmatprep.subr.mxu0 %v227
    %630 = vmatpush1.msra.mxu0 %v226
    %631 = vmatprep.subr.mxu0 %v231
    %632 = vmatpush1.msra.mxu0 %v230
    %633 = vmatprep.subr.mxu0 %v235
    %634 = vmatpush1.msra.mxu0 %v234
    %635 = vmatprep.subr.mxu0 %v239
    %636 = vmatpush1.msra.mxu0 %v238
    %637 = vmatprep.subr.mxu0 %v243
    %638 = vmatpush1.msra.mxu0 %v242
    %639 = vmatprep.subr.mxu0 %v247
    %640 = vmatpush1.msra.mxu0 %v246
    %641 = vmatprep.subr.mxu0 %v251
    %642 = vmatpush1.msra.mxu0 %v250
    %643 = vmatprep.subr.mxu0 %v255
    %644 = vmatpush1.msra.mxu0 %v254
    %645 = vmatprep.subr.mxu0 %v259
    %646 = vmatpush1.msra.mxu0 %v258
    %647 = vmatprep.subr.mxu0 %v263
    %648 = vmatpush1.msra.mxu0 %v262
    %649 = vmatprep.subr.mxu0 %v267
    %650 = vmatpush1.msra.mxu0 %v266
    %651 = vmatprep.subr.mxu0 %v271
    %652 = vmatpush1.msra.mxu0 %v270
    %653 = vmatprep.subr.mxu0 %v275
    %654 = vmatpush1.msra.mxu0 %v274
    %655 = vmatprep.subr.mxu0 %v279
    %656 = vmatpush1.msra.mxu0 %v278
    %657 = vmatprep.subr.mxu0 %v283
    %658 = vmatpush1.msra.mxu0 %v282
    %659 = vmatprep.subr.mxu0 %v287
    %660 = vmatpush1.msra.mxu0 %v286
    %661 = vmatprep.subr.mxu0 %v291
    %662 = vmatpush1.msra.mxu0 %v290
    %663 = vmatprep.subr.mxu0 %v295
    %664 = vmatpush1.msra.mxu0 %v294
    %665 = vmatprep.subr.mxu0 %v299
    %666 = vmatpush1.msra.mxu0 %v298
    %667 = vmatprep.subr.mxu0 %v303
    %668 = vmatpush1.msra.mxu0 %v302
    %669 = vmatprep.subr.mxu0 %v307
    %670 = vmatpush1.msra.mxu0 %v306
    %671 = vmatprep.subr.mxu0 %v311
    %672 = vmatpush1.msra.mxu0 %v310
    %673 = vmatprep.subr.mxu0 %v315
    %674 = vmatpush1.msra.mxu0 %v314
    %675 = vmatprep.subr.mxu0 %v319
    %676 = vmatpush1.msra.mxu0 %v318
    %677 = vmatprep.subr.mxu0 %v323
    %678 = vmatpush1.msra.mxu0 %v322
    %679 = vmatprep.subr.mxu0 %v327
    %680 = vmatpush1.msra.mxu0 %v326
    %681 = vmatprep.subr.mxu0 %v331
    %682 = vmatpush1.msra.mxu0 %v330
    %683 = vmatprep.mubr.f32.mxu0 %v74
    %684 = vmatmul.mubr.f32.gmra.mrb[0].mxu0 %v73
    %v685 = vpop.f32.mrb[0].mxu0
    %v686 = vadd.f32 %v615, %v685
    %v687 = vpop.f32.mrb[0].mxu0
    %v688 = vadd.f32 %v617, %v687
    %689 = vdwg.mxu0
    %690 = vmatprep.subr.mxu0 %v335
    %691 = vmatpush1.msra.mxu0 %v334
    %692 = vmatprep.subr.mxu0 %v339
    %693 = vmatpush1.msra.mxu0 %v338
    %694 = vmatprep.subr.mxu0 %v343
    %695 = vmatpush1.msra.mxu0 %v342
    %696 = vmatprep.subr.mxu0 %v347
    %697 = vmatpush1.msra.mxu0 %v346
    %698 = vmatprep.subr.mxu0 %v351
    %699 = vmatpush1.msra.mxu0 %v350
    %700 = vmatprep.subr.mxu0 %v355
    %701 = vmatpush1.msra.mxu0 %v354
    %702 = vmatprep.subr.mxu0 %v359
    %703 = vmatpush1.msra.mxu0 %v358
    %704 = vmatprep.subr.mxu0 %v363
    %705 = vmatpush1.msra.mxu0 %v362
    %706 = vmatprep.subr.mxu0 %v367
    %707 = vmatpush1.msra.mxu0 %v366
    %708 = vmatprep.subr.mxu0 %v371
    %709 = vmatpush1.msra.mxu0 %v370
    %710 = vmatprep.subr.mxu0 %v375
    %711 = vmatpush1.msra.mxu0 %v374
    %712 = vmatprep.subr.mxu0 %v379
    %713 = vmatpush1.msra.mxu0 %v378
    %714 = vmatprep.subr.mxu0 %v383
    %715 = vmatpush1.msra.mxu0 %v382
    %716 = vmatprep.subr.mxu0 %v387
    %717 = vmatpush1.msra.mxu0 %v386
    %718 = vmatprep.subr.mxu0 %v391
    %719 = vmatpush1.msra.mxu0 %v390
    %720 = vmatprep.subr.mxu0 %v395
    %721 = vmatpush1.msra.mxu0 %v394
    %722 = vmatprep.subr.mxu0 %v399
    %723 = vmatpush1.msra.mxu0 %v398
    %724 = vmatprep.subr.mxu0 %v403
    %725 = vmatpush1.msra.mxu0 %v402
    %726 = vmatprep.subr.mxu0 %v407
    %727 = vmatpush1.msra.mxu0 %v406
    %728 = vmatprep.subr.mxu0 %v411
    %729 = vmatpush1.msra.mxu0 %v410
    %730 = vmatprep.subr.mxu0 %v415
    %731 = vmatpush1.msra.mxu0 %v414
    %732 = vmatprep.subr.mxu0 %v419
    %733 = vmatpush1.msra.mxu0 %v418
    %734 = vmatprep.subr.mxu0 %v423
    %735 = vmatpush1.msra.mxu0 %v422
    %736 = vmatprep.subr.mxu0 %v427
    %737 = vmatpush1.msra.mxu0 %v426
    %738 = vmatprep.subr.mxu0 %v431
    %739 = vmatpush1.msra.mxu0 %v430
    %740 = vmatprep.subr.mxu0 %v435
    %741 = vmatpush1.msra.mxu0 %v434
    %742 = vmatprep.subr.mxu0 %v439
    %743 = vmatpush1.msra.mxu0 %v438
    %744 = vmatprep.subr.mxu0 %v443
    %745 = vmatpush1.msra.mxu0 %v442
    %746 = vmatprep.subr.mxu0 %v447
    %747 = vmatpush1.msra.mxu0 %v446
    %748 = vmatprep.subr.mxu0 %v451
    %749 = vmatpush1.msra.mxu0 %v450
    %750 = vmatprep.subr.mxu0 %v455
    %751 = vmatpush1.msra.mxu0 %v454
    %752 = vmatprep.subr.mxu0 %v459
    %753 = vmatpush1.msra.mxu0 %v458
    %754 = vmatprep.mubr.f32.mxu0 %v76
    %755 = vmatmul.mubr.f32.gmra.mrb[0].mxu0 %v75
    %v756 = vpop.f32.mrb[0].mxu0
    %v757 = vadd.f32 %v686, %v756
    %v758 = vpop.f32.mrb[0].mxu0
    %v759 = vadd.f32 %v688, %v758
    %760 = vdwg.mxu0
    %761 = vmatprep.subr.mxu0 %v463
    %762 = vmatpush1.msra.mxu0 %v462
    %763 = vmatprep.subr.mxu0 %v467
    %764 = vmatpush1.msra.mxu0 %v466
    %765 = vmatprep.subr.mxu0 %v471
    %766 = vmatpush1.msra.mxu0 %v470
    %767 = vmatprep.subr.mxu0 %v475
    %768 = vmatpush1.msra.mxu0 %v474
    %769 = vmatprep.subr.mxu0 %v479
    %770 = vmatpush1.msra.mxu0 %v478
    %771 = vmatprep.subr.mxu0 %v483
    %772 = vmatpush1.msra.mxu0 %v482
    %773 = vmatprep.subr.mxu0 %v487
    %774 = vmatpush1.msra.mxu0 %v486
    %775 = vmatprep.subr.mxu0 %v491
    %776 = vmatpush1.msra.mxu0 %v490
    %777 = vmatprep.subr.mxu0 %v495
    %778 = vmatpush1.msra.mxu0 %v494
    %779 = vmatprep.subr.mxu0 %v499
    %780 = vmatpush1.msra.mxu0 %v498
    %781 = vmatprep.subr.mxu0 %v503
    %782 = vmatpush1.msra.mxu0 %v502
    %783 = vmatprep.subr.mxu0 %v507
    %784 = vmatpush1.msra.mxu0 %v506
    %785 = vmatprep.subr.mxu0 %v511
    %786 = vmatpush1.msra.mxu0 %v510
    %787 = vmatprep.subr.mxu0 %v515
    %788 = vmatpush1.msra.mxu0 %v514
    %789 = vmatprep.subr.mxu0 %v519
    %790 = vmatpush1.msra.mxu0 %v518
    %791 = vmatprep.subr.mxu0 %v523
    %792 = vmatpush1.msra.mxu0 %v522
    %793 = vmatprep.subr.mxu0 0.0
    %794 = vmatpush1.msra.mxu0 0.0
    %795 = vmatprep.subr.mxu0 0.0
    %796 = vmatpush1.msra.mxu0 0.0
    %797 = vmatprep.subr.mxu0 0.0
    %798 = vmatpush1.msra.mxu0 0.0
    %799 = vmatprep.subr.mxu0 0.0
    %800 = vmatpush1.msra.mxu0 0.0
    %801 = vmatprep.subr.mxu0 0.0
    %802 = vmatpush1.msra.mxu0 0.0
    %803 = vmatprep.subr.mxu0 0.0
    %804 = vmatpush1.msra.mxu0 0.0
    %805 = vmatprep.subr.mxu0 0.0
    %806 = vmatpush1.msra.mxu0 0.0
    %807 = vmatprep.subr.mxu0 0.0
    %808 = vmatpush1.msra.mxu0 0.0
    %809 = vmatprep.subr.mxu0 0.0
    %810 = vmatpush1.msra.mxu0 0.0
    %811 = vmatprep.subr.mxu0 0.0
    %812 = vmatpush1.msra.mxu0 0.0
    %813 = vmatprep.subr.mxu0 0.0
    %814 = vmatpush1.msra.mxu0 0.0
    %815 = vmatprep.subr.mxu0 0.0
    %816 = vmatpush1.msra.mxu0 0.0
    %817 = vmatprep.subr.mxu0 0.0
    %818 = vmatpush1.msra.mxu0 0.0
    %819 = vmatprep.subr.mxu0 0.0
    %820 = vmatpush1.msra.mxu0 0.0
    %821 = vmatprep.subr.mxu0 0.0
    %822 = vmatpush1.msra.mxu0 0.0
    %823 = vmatprep.subr.mxu0 0.0
    %824 = vmatpush1.msra.mxu0 0.0
    %825 = vmatprep.mubr.f32.mxu0 0.0
    %826 = vmatmul.mubr.f32.gmra.mrb[0].mxu0 %v77
    %v827 = vpop.f32.mrb[0].mxu0
    %v828 = vadd.f32 %v757, %v827
    %v829 = vpop.f32.mrb[0].mxu0
    %v830 = vadd.f32 %v759, %v829
    %831 = vdwg.mxu0
    %832 = vmatprep.subr.mxu0 %v81
    %833 = vmatpush1.msra.mxu0 %v80
    %834 = vmatprep.subr.mxu0 %v85
    %835 = vmatpush1.msra.mxu0 %v84
    %836 = vmatprep.subr.mxu0 %v89
    %837 = vmatpush1.msra.mxu0 %v88
    %838 = vmatprep.subr.mxu0 %v93
    %839 = vmatpush1.msra.mxu0 %v92
    %840 = vmatprep.subr.mxu0 %v97
    %841 = vmatpush1.msra.mxu0 %v96
    %842 = vmatprep.subr.mxu0 %v101
    %843 = vmatpush1.msra.mxu0 %v100
    %844 = vmatprep.subr.mxu0 %v105
    %845 = vmatpush1.msra.mxu0 %v104
    %846 = vmatprep.subr.mxu0 %v109
    %847 = vmatpush1.msra.mxu0 %v108
    %848 = vmatprep.subr.mxu0 %v113
    %849 = vmatpush1.msra.mxu0 %v112
    %850 = vmatprep.subr.mxu0 %v117
    %851 = vmatpush1.msra.mxu0 %v116
    %852 = vmatprep.subr.mxu0 %v121
    %853 = vmatpush1.msra.mxu0 %v120
    %854 = vmatprep.subr.mxu0 %v125
    %855 = vmatpush1.msra.mxu0 %v124
    %856 = vmatprep.subr.mxu0 %v129
    %857 = vmatpush1.msra.mxu0 %v128
    %858 = vmatprep.subr.mxu0 %v133
    %859 = vmatpush1.msra.mxu0 %v132
    %860 = vmatprep.subr.mxu0 %v137
    %861 = vmatpush1.msra.mxu0 %v136
    %862 = vmatprep.subr.mxu0 %v141
    %863 = vmatpush1.msra.mxu0 %v140
    %864 = vmatprep.subr.mxu0 %v145
    %865 = vmatpush1.msra.mxu0 %v144
    %866 = vmatprep.subr.mxu0 %v149
    %867 = vmatpush1.msra.mxu0 %v148
    %868 = vmatprep.subr.mxu0 %v153
    %869 = vmatpush1.msra.mxu0 %v152
    %870 = vmatprep.subr.mxu0 %v157
    %871 = vmatpush1.msra.mxu0 %v156
    %872 = vmatprep.subr.mxu0 %v161
    %873 = vmatpush1.msra.mxu0 %v160
    %874 = vmatprep.subr.mxu0 %v165
    %875 = vmatpush1.msra.mxu0 %v164
    %876 = vmatprep.subr.mxu0 %v169
    %877 = vmatpush1.msra.mxu0 %v168
    %878 = vmatprep.subr.mxu0 %v173
    %879 = vmatpush1.msra.mxu0 %v172
    %880 = vmatprep.subr.mxu0 %v177
    %881 = vmatpush1.msra.mxu0 %v176
    %882 = vmatprep.subr.mxu0 %v181
    %883 = vmatpush1.msra.mxu0 %v180
    %884 = vmatprep.subr.mxu0 %v185
    %885 = vmatpush1.msra.mxu0 %v184
    %886 = vmatprep.subr.mxu0 %v189
    %887 = vmatpush1.msra.mxu0 %v188
    %888 = vmatprep.subr.mxu0 %v193
    %889 = vmatpush1.msra.mxu0 %v192
    %890 = vmatprep.subr.mxu0 %v197
    %891 = vmatpush1.msra.mxu0 %v196
    %892 = vmatprep.subr.mxu0 %v201
    %893 = vmatpush1.msra.mxu0 %v200
    %894 = vmatprep.subr.mxu0 %v205
    %895 = vmatpush1.msra.mxu0 %v204
    %896 = vmatprep.mubr.f32.mxu0 %v72
    %897 = vmatmul.mubr.f32.gmra.mrb[0].mxu0 %v71
    %v898 = vpop.f32.mrb[0].mxu0
    %v899 = vadd.f32 %v539, %v898
    %v900 = vpop.f32.mrb[0].mxu0
    %v901 = vadd.f32 %v543, %v900
    %902 = vdwg.mxu0
    %903 = vmatprep.subr.mxu0 %v209
    %904 = vmatpush1.msra.mxu0 %v208
    %905 = vmatprep.subr.mxu0 %v213
    %906 = vmatpush1.msra.mxu0 %v212
    %907 = vmatprep.subr.mxu0 %v217
    %908 = vmatpush1.msra.mxu0 %v216
    %909 = vmatprep.subr.mxu0 %v221
    %910 = vmatpush1.msra.mxu0 %v220
    %911 = vmatprep.subr.mxu0 %v225
    %912 = vmatpush1.msra.mxu0 %v224
    %913 = vmatprep.subr.mxu0 %v229
    %914 = vmatpush1.msra.mxu0 %v228
    %915 = vmatprep.subr.mxu0 %v233
    %916 = vmatpush1.msra.mxu0 %v232
    %917 = vmatprep.subr.mxu0 %v237
    %918 = vmatpush1.msra.mxu0 %v236
    %919 = vmatprep.subr.mxu0 %v241
    %920 = vmatpush1.msra.mxu0 %v240
    %921 = vmatprep.subr.mxu0 %v245
    %922 = vmatpush1.msra.mxu0 %v244
    %923 = vmatprep.subr.mxu0 %v249
    %924 = vmatpush1.msra.mxu0 %v248
    %925 = vmatprep.subr.mxu0 %v253
    %926 = vmatpush1.msra.mxu0 %v252
    %927 = vmatprep.subr.mxu0 %v257
    %928 = vmatpush1.msra.mxu0 %v256
    %929 = vmatprep.subr.mxu0 %v261
    %930 = vmatpush1.msra.mxu0 %v260
    %931 = vmatprep.subr.mxu0 %v265
    %932 = vmatpush1.msra.mxu0 %v264
    %933 = vmatprep.subr.mxu0 %v269
    %934 = vmatpush1.msra.mxu0 %v268
    %935 = vmatprep.subr.mxu0 %v273
    %936 = vmatpush1.msra.mxu0 %v272
    %937 = vmatprep.subr.mxu0 %v277
    %938 = vmatpush1.msra.mxu0 %v276
    %939 = vmatprep.subr.mxu0 %v281
    %940 = vmatpush1.msra.mxu0 %v280
    %941 = vmatprep.subr.mxu0 %v285
    %942 = vmatpush1.msra.mxu0 %v284
    %943 = vmatprep.subr.mxu0 %v289
    %944 = vmatpush1.msra.mxu0 %v288
    %945 = vmatprep.subr.mxu0 %v293
    %946 = vmatpush1.msra.mxu0 %v292
    %947 = vmatprep.subr.mxu0 %v297
    %948 = vmatpush1.msra.mxu0 %v296
    %949 = vmatprep.subr.mxu0 %v301
    %950 = vmatpush1.msra.mxu0 %v300
    %951 = vmatprep.subr.mxu0 %v305
    %952 = vmatpush1.msra.mxu0 %v304
    %953 = vmatprep.subr.mxu0 %v309
    %954 = vmatpush1.msra.mxu0 %v308
    %955 = vmatprep.subr.mxu0 %v313
    %956 = vmatpush1.msra.mxu0 %v312
    %957 = vmatprep.subr.mxu0 %v317
    %958 = vmatpush1.msra.mxu0 %v316
    %959 = vmatprep.subr.mxu0 %v321
    %960 = vmatpush1.msra.mxu0 %v320
    %961 = vmatprep.subr.mxu0 %v325
    %962 = vmatpush1.msra.mxu0 %v324
    %963 = vmatprep.subr.mxu0 %v329
    %964 = vmatpush1.msra.mxu0 %v328
    %965 = vmatprep.subr.mxu0 %v333
    %966 = vmatpush1.msra.mxu0 %v332
    %967 = vmatprep.mubr.f32.mxu0 %v74
    %968 = vmatmul.mubr.f32.gmra.mrb[0].mxu0 %v73
    %v969 = vpop.f32.mrb[0].mxu0
    %v970 = vadd.f32 %v899, %v969
    %v971 = vpop.f32.mrb[0].mxu0
    %v972 = vadd.f32 %v901, %v971
    %973 = vdwg.mxu0
    %974 = vmatprep.subr.mxu0 %v337
    %975 = vmatpush1.msra.mxu0 %v336
    %976 = vmatprep.subr.mxu0 %v341
    %977 = vmatpush1.msra.mxu0 %v340
    %978 = vmatprep.subr.mxu0 %v345
    %979 = vmatpush1.msra.mxu0 %v344
    %980 = vmatprep.subr.mxu0 %v349
    %981 = vmatpush1.msra.mxu0 %v348
    %982 = vmatprep.subr.mxu0 %v353
    %983 = vmatpush1.msra.mxu0 %v352
    %984 = vmatprep.subr.mxu0 %v357
    %985 = vmatpush1.msra.mxu0 %v356
    %986 = vmatprep.subr.mxu0 %v361
    %987 = vmatpush1.msra.mxu0 %v360
    %988 = vmatprep.subr.mxu0 %v365
    %989 = vmatpush1.msra.mxu0 %v364
    %990 = vmatprep.subr.mxu0 %v369
    %991 = vmatpush1.msra.mxu0 %v368
    %992 = vmatprep.subr.mxu0 %v373
    %993 = vmatpush1.msra.mxu0 %v372
    %994 = vmatprep.subr.mxu0 %v377
    %995 = vmatpush1.msra.mxu0 %v376
    %996 = vmatprep.subr.mxu0 %v381
    %997 = vmatpush1.msra.mxu0 %v380
    %998 = vmatprep.subr.mxu0 %v385
    %999 = vmatpush1.msra.mxu0 %v384
    %1000 = vmatprep.subr.mxu0 %v389
    %1001 = vmatpush1.msra.mxu0 %v388
    %1002 = vmatprep.subr.mxu0 %v393
    %1003 = vmatpush1.msra.mxu0 %v392
    %1004 = vmatprep.subr.mxu0 %v397
    %1005 = vmatpush1.msra.mxu0 %v396
    %1006 = vmatprep.subr.mxu0 %v401
    %1007 = vmatpush1.msra.mxu0 %v400
    %1008 = vmatprep.subr.mxu0 %v405
    %1009 = vmatpush1.msra.mxu0 %v404
    %1010 = vmatprep.subr.mxu0 %v409
    %1011 = vmatpush1.msra.mxu0 %v408
    %1012 = vmatprep.subr.mxu0 %v413
    %1013 = vmatpush1.msra.mxu0 %v412
    %1014 = vmatprep.subr.mxu0 %v417
    %1015 = vmatpush1.msra.mxu0 %v416
    %1016 = vmatprep.subr.mxu0 %v421
    %1017 = vmatpush1.msra.mxu0 %v420
    %1018 = vmatprep.subr.mxu0 %v425
    %1019 = vmatpush1.msra.mxu0 %v424
    %1020 = vmatprep.subr.mxu0 %v429
    %1021 = vmatpush1.msra.mxu0 %v428
    %1022 = vmatprep.subr.mxu0 %v433
    %1023 = vmatpush1.msra.mxu0 %v432
    %1024 = vmatprep.subr.mxu0 %v437
    %1025 = vmatpush1.msra.mxu0 %v436
    %1026 = vmatprep.subr.mxu0 %v441
    %1027 = vmatpush1.msra.mxu0 %v440
    %1028 = vmatprep.subr.mxu0 %v445
    %1029 = vmatpush1.msra.mxu0 %v444
    %1030 = vmatprep.subr.mxu0 %v449
    %1031 = vmatpush1.msra.mxu0 %v448
    %1032 = vmatprep.subr.mxu0 %v453
    %1033 = vmatpush1.msra.mxu0 %v452
    %1034 = vmatprep.subr.mxu0 %v457
    %1035 = vmatpush1.msra.mxu0 %v456
    %1036 = vmatprep.subr.mxu0 %v461
    %1037 = vmatpush1.msra.mxu0 %v460
    %1038 = vmatprep.mubr.f32.mxu0 %v76
    %1039 = vmatmul.mubr.f32.gmra.mrb[0].mxu0 %v75
    %v1040 = vpop.f32.mrb[0].mxu0
    %v1041 = vadd.f32 %v970, %v1040
    %v1042 = vpop.f32.mrb[0].mxu0
    %v1043 = vadd.f32 %v972, %v1042
    %1044 = vdwg.mxu0
    %1045 = vmatprep.subr.mxu0 %v465
    %1046 = vmatpush1.msra.mxu0 %v464
    %1047 = vmatprep.subr.mxu0 %v469
    %1048 = vmatpush1.msra.mxu0 %v468
    %1049 = vmatprep.subr.mxu0 %v473
    %1050 = vmatpush1.msra.mxu0 %v472
    %1051 = vmatprep.subr.mxu0 %v477
    %1052 = vmatpush1.msra.mxu0 %v476
    %1053 = vmatprep.subr.mxu0 %v481
    %1054 = vmatpush1.msra.mxu0 %v480
    %1055 = vmatprep.subr.mxu0 %v485
    %1056 = vmatpush1.msra.mxu0 %v484
    %1057 = vmatprep.subr.mxu0 %v489
    %1058 = vmatpush1.msra.mxu0 %v488
    %1059 = vmatprep.subr.mxu0 %v493
    %1060 = vmatpush1.msra.mxu0 %v492
    %1061 = vmatprep.subr.mxu0 %v497
    %1062 = vmatpush1.msra.mxu0 %v496
    %1063 = vmatprep.subr.mxu0 %v501
    %1064 = vmatpush1.msra.mxu0 %v500
    %1065 = vmatprep.subr.mxu0 %v505
    %1066 = vmatpush1.msra.mxu0 %v504
    %1067 = vmatprep.subr.mxu0 %v509
    %1068 = vmatpush1.msra.mxu0 %v508
    %1069 = vmatprep.subr.mxu0 %v513
    %1070 = vmatpush1.msra.mxu0 %v512
    %1071 = vmatprep.subr.mxu0 %v517
    %1072 = vmatpush1.msra.mxu0 %v516
    %1073 = vmatprep.subr.mxu0 %v521
    %1074 = vmatpush1.msra.mxu0 %v520
    %1075 = vmatprep.subr.mxu0 %v525
    %1076 = vmatpush1.msra.mxu0 %v524
    %1077 = vmatprep.subr.mxu0 0.0
    %1078 = vmatpush1.msra.mxu0 0.0
    %1079 = vmatprep.subr.mxu0 0.0
    %1080 = vmatpush1.msra.mxu0 0.0
    %1081 = vmatprep.subr.mxu0 0.0
    %1082 = vmatpush1.msra.mxu0 0.0
    %1083 = vmatprep.subr.mxu0 0.0
    %1084 = vmatpush1.msra.mxu0 0.0
    %1085 = vmatprep.subr.mxu0 0.0
    %1086 = vmatpush1.msra.mxu0 0.0
    %1087 = vmatprep.subr.mxu0 0.0
    %1088 = vmatpush1.msra.mxu0 0.0
    %1089 = vmatprep.subr.mxu0 0.0
    %1090 = vmatpush1.msra.mxu0 0.0
    %1091 = vmatprep.subr.mxu0 0.0
    %1092 = vmatpush1.msra.mxu0 0.0
    %1093 = vmatprep.subr.mxu0 0.0
    %1094 = vmatpush1.msra.mxu0 0.0
    %1095 = vmatprep.subr.mxu0 0.0
    %1096 = vmatpush1.msra.mxu0 0.0
    %1097 = vmatprep.subr.mxu0 0.0
    %1098 = vmatpush1.msra.mxu0 0.0
    %1099 = vmatprep.subr.mxu0 0.0
    %1100 = vmatpush1.msra.mxu0 0.0
    %1101 = vmatprep.subr.mxu0 0.0
    %1102 = vmatpush1.msra.mxu0 0.0
    %1103 = vmatprep.subr.mxu0 0.0
    %1104 = vmatpush1.msra.mxu0 0.0
    %1105 = vmatprep.subr.mxu0 0.0
    %1106 = vmatpush1.msra.mxu0 0.0
    %1107 = vmatprep.subr.mxu0 0.0
    %1108 = vmatpush1.msra.mxu0 0.0
    %1109 = vmatprep.mubr.f32.mxu0 0.0
    %1110 = vmatmul.mubr.f32.gmra.mrb[0].mxu0 %v77
    %v1111 = vpop.f32.mrb[0].mxu0
    %v1112 = vadd.f32 %v1041, %v1111
    %v1113 = vpop.f32.mrb[0].mxu0
    %v1114 = vadd.f32 %v1043, %v1113
    %1115 = vdwg.mxu0
    %v1116 = vmax.f32 %v828, 0.0
    %v1117 = vmax.f32 %v830, 0.0
    %v1118 = vmax.f32 %v1112, 0.0
    %v1119 = vmax.f32 %v1114, 0.0
    %v1120 = vld [vmem:[#allocation6] sm:$0xff]
    %v1121 = vld [vmem:[#allocation6 + $0x8] sm:$0xff]
    %v1122 = vld [vmem:[#allocation6 + $0x10] sm:$0xff]
    %v1123 = vld [vmem:[#allocation6 + $0x18] sm:$0xff]
    %v1124 = vld [vmem:[#allocation6 + $0x20] sm:$0xff]
    %v1125 = vld [vmem:[#allocation6 + $0x28] sm:$0xff]
    %v1126 = vld [vmem:[#allocation6 + $0x30] sm:$0xff]
    %v1127 = vld [vmem:[#allocation6 + $0x38] sm:$0xff]
    %v1128 = vld [vmem:[#allocation6 + $0x40] sm:$0xff]
    %v1129 = vld [vmem:[#allocation6 + $0x48] sm:$0xff]
    %v1130 = vld [vmem:[#allocation6 + $0x50] sm:$0xff]
    %v1131 = vld [vmem:[#allocation6 + $0x58] sm:$0xff]
    %v1132 = vld [vmem:[#allocation6 + $0x60] sm:$0xff]
    %v1133 = vld [vmem:[#allocation6 + $0x68] sm:$0xff]
    %v1134 = vld [vmem:[#allocation6 + $0x70] sm:$0xff]
    %v1135 = vld [vmem:[#allocation6 + $0x78] sm:$0xff]
    %v1136 = vld [vmem:[#allocation6 + $0x80] sm:$0xff]
    %v1137 = vld [vmem:[#allocation6 + $0x88] sm:$0xff]
    %v1138 = vld [vmem:[#allocation6 + $0x90] sm:$0xff]
    %v1139 = vld [vmem:[#allocation6 + $0x98] sm:$0xff]
    %v1140 = vld [vmem:[#allocation6 + $0xa0] sm:$0xff]
    %v1141 = vld [vmem:[#allocation6 + $0xa8] sm:$0xff]
    %v1142 = vld [vmem:[#allocation6 + $0xb0] sm:$0xff]
    %v1143 = vld [vmem:[#allocation6 + $0xb8] sm:$0xff]
    %v1144 = vld [vmem:[#allocation6 + $0xc0] sm:$0xff]
    %v1145 = vld [vmem:[#allocation6 + $0xc8] sm:$0xff]
    %v1146 = vld [vmem:[#allocation6 + $0xd0] sm:$0xff]
    %v1147 = vld [vmem:[#allocation6 + $0xd8] sm:$0xff]
    %v1148 = vld [vmem:[#allocation6 + $0xe0] sm:$0xff]
    %v1149 = vld [vmem:[#allocation6 + $0xe8] sm:$0xff]
    %v1150 = vld [vmem:[#allocation6 + $0xf0] sm:$0xff]
    %v1151 = vld [vmem:[#allocation6 + $0xf8] sm:$0xff]
    %v1152 = vld [vmem:[#allocation6 + $0x100] sm:$0xff]
    %v1153 = vld [vmem:[#allocation6 + $0x108] sm:$0xff]
    %v1154 = vld [vmem:[#allocation6 + $0x110] sm:$0xff]
    %v1155 = vld [vmem:[#allocation6 + $0x118] sm:$0xff]
    %v1156 = vld [vmem:[#allocation6 + $0x120] sm:$0xff]
    %v1157 = vld [vmem:[#allocation6 + $0x128] sm:$0xff]
    %v1158 = vld [vmem:[#allocation6 + $0x130] sm:$0xff]
    %v1159 = vld [vmem:[#allocation6 + $0x138] sm:$0xff]
    %v1160 = vld [vmem:[#allocation6 + $0x140] sm:$0xff]
    %v1161 = vld [vmem:[#allocation6 + $0x148] sm:$0xff]
    %v1162 = vld [vmem:[#allocation6 + $0x150] sm:$0xff]
    %v1163 = vld [vmem:[#allocation6 + $0x158] sm:$0xff]
    %v1164 = vld [vmem:[#allocation6 + $0x160] sm:$0xff]
    %v1165 = vld [vmem:[#allocation6 + $0x168] sm:$0xff]
    %v1166 = vld [vmem:[#allocation6 + $0x170] sm:$0xff]
    %v1167 = vld [vmem:[#allocation6 + $0x178] sm:$0xff]
    %v1168 = vld [vmem:[#allocation6 + $0x180] sm:$0xff]
    %v1169 = vld [vmem:[#allocation6 + $0x188] sm:$0xff]
    %v1170 = vld [vmem:[#allocation6 + $0x190] sm:$0xff]
    %v1171 = vld [vmem:[#allocation6 + $0x198] sm:$0xff]
    %v1172 = vld [vmem:[#allocation6 + $0x1a0] sm:$0xff]
    %v1173 = vld [vmem:[#allocation6 + $0x1a8] sm:$0xff]
    %v1174 = vld [vmem:[#allocation6 + $0x1b0] sm:$0xff]
    %v1175 = vld [vmem:[#allocation6 + $0x1b8] sm:$0xff]
    %v1176 = vld [vmem:[#allocation6 + $0x1c0] sm:$0xff]
    %v1177 = vld [vmem:[#allocation6 + $0x1c8] sm:$0xff]
    %v1178 = vld [vmem:[#allocation6 + $0x1d0] sm:$0xff]
    %v1179 = vld [vmem:[#allocation6 + $0x1d8] sm:$0xff]
    %v1180 = vld [vmem:[#allocation6 + $0x1e0] sm:$0xff]
    %v1181 = vld [vmem:[#allocation6 + $0x1e8] sm:$0xff]
    %v1182 = vld [vmem:[#allocation6 + $0x1f0] sm:$0xff]
    %v1183 = vld [vmem:[#allocation6 + $0x1f8] sm:$0xff]
    %v1184 = vld [vmem:[#allocation7] sm:$0x1]
    %v1186 = vlaneseq
    %v1187 = vshrl.u32 %v1186, 7
    %v1188 = vsub.s32 0, %v1187
    %v1189 = vrot.slane %v1184, %v1188
    %1191 = vmatprep.subr.mxu0 0.0
    %1192 = vmatpush1.msra.mxu0 %v1120
    %1193 = vmatprep.subr.mxu0 0.0
    %1194 = vmatpush1.msra.mxu0 %v1121
    %1195 = vmatprep.subr.mxu0 0.0
    %1196 = vmatpush1.msra.mxu0 %v1122
    %1197 = vmatprep.subr.mxu0 0.0
    %1198 = vmatpush1.msra.mxu0 %v1123
    %1199 = vmatprep.subr.mxu0 0.0
    %1200 = vmatpush1.msra.mxu0 %v1124
    %1201 = vmatprep.subr.mxu0 0.0
    %1202 = vmatpush1.msra.mxu0 %v1125
    %1203 = vmatprep.subr.mxu0 0.0
    %1204 = vmatpush1.msra.mxu0 %v1126
    %1205 = vmatprep.subr.mxu0 0.0
    %1206 = vmatpush1.msra.mxu0 %v1127
    %1207 = vmatprep.subr.mxu0 0.0
    %1208 = vmatpush1.msra.mxu0 %v1128
    %1209 = vmatprep.subr.mxu0 0.0
    %1210 = vmatpush1.msra.mxu0 %v1129
    %1211 = vmatprep.subr.mxu0 0.0
    %1212 = vmatpush1.msra.mxu0 %v1130
    %1213 = vmatprep.subr.mxu0 0.0
    %1214 = vmatpush1.msra.mxu0 %v1131
    %1215 = vmatprep.subr.mxu0 0.0
    %1216 = vmatpush1.msra.mxu0 %v1132
    %1217 = vmatprep.subr.mxu0 0.0
    %1218 = vmatpush1.msra.mxu0 %v1133
    %1219 = vmatprep.subr.mxu0 0.0
    %1220 = vmatpush1.msra.mxu0 %v1134
    %1221 = vmatprep.subr.mxu0 0.0
    %1222 = vmatpush1.msra.mxu0 %v1135
    %1223 = vmatprep.subr.mxu0 0.0
    %1224 = vmatpush1.msra.mxu0 %v1136
    %1225 = vmatprep.subr.mxu0 0.0
    %1226 = vmatpush1.msra.mxu0 %v1137
    %1227 = vmatprep.subr.mxu0 0.0
    %1228 = vmatpush1.msra.mxu0 %v1138
    %1229 = vmatprep.subr.mxu0 0.0
    %1230 = vmatpush1.msra.mxu0 %v1139
    %1231 = vmatprep.subr.mxu0 0.0
    %1232 = vmatpush1.msra.mxu0 %v1140
    %1233 = vmatprep.subr.mxu0 0.0
    %1234 = vmatpush1.msra.mxu0 %v1141
    %1235 = vmatprep.subr.mxu0 0.0
    %1236 = vmatpush1.msra.mxu0 %v1142
    %1237 = vmatprep.subr.mxu0 0.0
    %1238 = vmatpush1.msra.mxu0 %v1143
    %1239 = vmatprep.subr.mxu0 0.0
    %1240 = vmatpush1.msra.mxu0 %v1144
    %1241 = vmatprep.subr.mxu0 0.0
    %1242 = vmatpush1.msra.mxu0 %v1145
    %1243 = vmatprep.subr.mxu0 0.0
    %1244 = vmatpush1.msra.mxu0 %v1146
    %1245 = vmatprep.subr.mxu0 0.0
    %1246 = vmatpush1.msra.mxu0 %v1147
    %1247 = vmatprep.subr.mxu0 0.0
    %1248 = vmatpush1.msra.mxu0 %v1148
    %1249 = vmatprep.subr.mxu0 0.0
    %1250 = vmatpush1.msra.mxu0 %v1149
    %1251 = vmatprep.subr.mxu0 0.0
    %1252 = vmatpush1.msra.mxu0 %v1150
    %1253 = vmatprep.subr.mxu0 0.0
    %1254 = vmatpush1.msra.mxu0 %v1151
    %1255 = vmatprep.mubr.f32.mxu0 %v1117
    %1256 = vmatmul.mubr.f32.gmra.mrb[0].mxu0 %v1116
    %v1257 = vpop.f32.mrb[0].mxu0
    %v1258 = vadd.f32 %v1189, %v1257
    %v1259 = vpop.f32.mrb[0].mxu0
    %1260 = vdwg.mxu0
    %1261 = vmatprep.subr.mxu0 0.0
    %1262 = vmatpush1.msra.mxu0 %v1152
    %1263 = vmatprep.subr.mxu0 0.0
    %1264 = vmatpush1.msra.mxu0 %v1153
    %1265 = vmatprep.subr.mxu0 0.0
    %1266 = vmatpush1.msra.mxu0 %v1154
    %1267 = vmatprep.subr.mxu0 0.0
    %1268 = vmatpush1.msra.mxu0 %v1155
    %1269 = vmatprep.subr.mxu0 0.0
    %1270 = vmatpush1.msra.mxu0 %v1156
    %1271 = vmatprep.subr.mxu0 0.0
    %1272 = vmatpush1.msra.mxu0 %v1157
    %1273 = vmatprep.subr.mxu0 0.0
    %1274 = vmatpush1.msra.mxu0 %v1158
    %1275 = vmatprep.subr.mxu0 0.0
    %1276 = vmatpush1.msra.mxu0 %v1159
    %1277 = vmatprep.subr.mxu0 0.0
    %1278 = vmatpush1.msra.mxu0 %v1160
    %1279 = vmatprep.subr.mxu0 0.0
    %1280 = vmatpush1.msra.mxu0 %v1161
    %1281 = vmatprep.subr.mxu0 0.0
    %1282 = vmatpush1.msra.mxu0 %v1162
    %1283 = vmatprep.subr.mxu0 0.0
    %1284 = vmatpush1.msra.mxu0 %v1163
    %1285 = vmatprep.subr.mxu0 0.0
    %1286 = vmatpush1.msra.mxu0 %v1164
    %1287 = vmatprep.subr.mxu0 0.0
    %1288 = vmatpush1.msra.mxu0 %v1165
    %1289 = vmatprep.subr.mxu0 0.0
    %1290 = vmatpush1.msra.mxu0 %v1166
    %1291 = vmatprep.subr.mxu0 0.0
    %1292 = vmatpush1.msra.mxu0 %v1167
    %1293 = vmatprep.subr.mxu0 0.0
    %1294 = vmatpush1.msra.mxu0 %v1168
    %1295 = vmatprep.subr.mxu0 0.0
    %1296 = vmatpush1.msra.mxu0 %v1169
    %1297 = vmatprep.subr.mxu0 0.0
    %1298 = vmatpush1.msra.mxu0 %v1170
    %1299 = vmatprep.subr.mxu0 0.0
    %1300 = vmatpush1.msra.mxu0 %v1171
    %1301 = vmatprep.subr.mxu0 0.0
    %1302 = vmatpush1.msra.mxu0 %v1172
    %1303 = vmatprep.subr.mxu0 0.0
    %1304 = vmatpush1.msra.mxu0 %v1173
    %1305 = vmatprep.subr.mxu0 0.0
    %1306 = vmatpush1.msra.mxu0 %v1174
    %1307 = vmatprep.subr.mxu0 0.0
    %1308 = vmatpush1.msra.mxu0 %v1175
    %1309 = vmatprep.subr.mxu0 0.0
    %1310 = vmatpush1.msra.mxu0 %v1176
    %1311 = vmatprep.subr.mxu0 0.0
    %1312 = vmatpush1.msra.mxu0 %v1177
    %1313 = vmatprep.subr.mxu0 0.0
    %1314 = vmatpush1.msra.mxu0 %v1178
    %1315 = vmatprep.subr.mxu0 0.0
    %1316 = vmatpush1.msra.mxu0 %v1179
    %1317 = vmatprep.subr.mxu0 0.0
    %1318 = vmatpush1.msra.mxu0 %v1180
    %1319 = vmatprep.subr.mxu0 0.0
    %1320 = vmatpush1.msra.mxu0 %v1181
    %1321 = vmatprep.subr.mxu0 0.0
    %1322 = vmatpush1.msra.mxu0 %v1182
    %1323 = vmatprep.subr.mxu0 0.0
    %1324 = vmatpush1.msra.mxu0 %v1183
    %1325 = vmatprep.mubr.f32.mxu0 %v1119
    %1326 = vmatmul.mubr.f32.gmra.mrb[0].mxu0 %v1118
    %v1327 = vpop.f32.mrb[0].mxu0
    %v1328 = vadd.f32 %v1258, %v1327
    %v1329 = vpop.f32.mrb[0].mxu0
    %1330 = vdwg.mxu0
    %1331 = vst [vmem:[%s5] sm:$0xff] %v1328
    // Predicated region
    $region38: #{net_forward.1} parent=1 // pred_check
      _
    $region39: #{net_forward.1} parent=1 // pred_check_branch
      %1333 = sbr.rel (0) target = $region41
    $region40: #{net_forward.1} parent=1 // pred_region
      _
    $region41: #{net_forward.1} parent=1 // pred_fallthru
      _
    // Predicated region
    $region42: #{net_forward.1} parent=1 // pred_check
      _
    $region43: #{net_forward.1} parent=1 // pred_check_branch
      %1335 = sbr.rel (0) target = $region45
    $region44: #{net_forward.1} parent=1 // pred_region
      _
    $region45: #{net_forward.1} parent=1 // pred_fallthru
      _
    %1336 = vsyncpa [#allocation3], 1
    %1337 = vsyncpa [#allocation5], 1
    %1338 = vsyncpa [#allocation8], 1

</llo_original>
